<compile_context>
chip_gen: v7x
topology: tpu7x:2x2x1
jax: 0.10.0
libtpu: 0.0.40
codegen_flags: <defaults>
</compile_context>

<pallas_src>
import jax
import jax.numpy as jnp
from jax import lax
from jax.experimental import pallas as pl
from jax.experimental.pallas import tpu as pltpu


def receiver_kernel(ids_ref, x_ref, embw_ref, out_ref):
    # ids_ref  : (num_steps, Bt, 1) int32 -- ALL message ids, resident in VMEM
    # x_ref    : (Bt, N, F) f32           -- candidate features for this batch tile
    # embw_ref : (C, F)     f32           -- fused table emb @ W, resident in VMEM
    # out_ref  : (1, N, Bt) f32           -- lane-dense (transposed) log-prob block
    Bt, N, F = x_ref.shape
    C = embw_ref.shape[0]
    s = pl.program_id(0)

    # Gather v[b] = embW[ids[b]] via a one-hot MXU matmul (TPU-friendly gather,
    # no per-row DMA; exact, rows are selected by multiplying with 0/1).
    ids = ids_ref[s]                                                     # (Bt, 1)
    onehot = (ids == lax.broadcasted_iota(jnp.int32, (Bt, C), 1)).astype(jnp.float32)
    v = jnp.dot(onehot, embw_ref[...], preferred_element_type=jnp.float32)  # (Bt, F)

    # scores[b, n] = x[b, n, :] · v[b, :]   (VPU multiply + reduce over F;
    # the bias term h_s·b is constant over n and cancels in log_softmax).
    scores = jnp.sum(x_ref[...] * v[:, None, :], axis=-1)                # (Bt, N)

    # Transpose to (N, Bt): the softmax reductions and the final store become
    # lane-dense (Bt = 128 lanes) instead of 8/128 masked lanes.
    scores_t = scores.T                                                  # (N, Bt)
    m = jnp.max(scores_t, axis=0, keepdims=True)
    shifted = scores_t - m
    lse = jnp.log(jnp.sum(jnp.exp(shifted), axis=0, keepdims=True))
    out_ref[0] = (shifted - lse).astype(out_ref.dtype)


def receiver_forward(x, sender_out, w, b, emb, *, block_b=128):
    """x: (B, N, F) f32, sender_out: (B,) int, w: (E, F), b: (E,), emb: (C, E).

    `b` is accepted for API parity with the nn.Module but unused: the bias
    contributes a per-batch constant (h_s · b) to all N scores, which the
    log_softmax cancels exactly.
    """
    del b
    B, N, F = x.shape
    E, Fw = w.shape
    assert Fw == F
    C = emb.shape[0]

    # Fused gather table: v[b] = emb[id_b] @ W == (emb @ W)[id_b].
    embw = jnp.dot(emb, w).astype(jnp.float32)                           # (C, F)

    # Batch tile: as large as block_b but rounded so padding stays small.
    Bt = min(int(block_b), -(-B // 8) * 8)
    num_steps = -(-B // Bt)                     # ceil division
    Bp = num_steps * Bt
    if Bp != B:   # zero-pad batch (id 0 is valid; padded rows are sliced off)
        x = jnp.pad(x, ((0, Bp - B), (0, 0), (0, 0)))
        sender_out = jnp.pad(sender_out, [(0, Bp - B)])
    ids = sender_out.astype(jnp.int32).reshape(num_steps, Bt, 1)

    out = pl.pallas_call(
        receiver_kernel,
        out_shape=jax.ShapeDtypeStruct((num_steps, N, Bt), jnp.float32),
        grid_spec=pltpu.PrefetchScalarGridSpec(
            num_scalar_prefetch=0,
            grid=(num_steps,),
            in_specs=[
                # All ids resident (single DMA, indexed by program_id in-kernel).
                pl.BlockSpec((num_steps, Bt, 1), lambda s: (0, 0, 0)),
                # Per-step batch tile of candidate features.
                pl.BlockSpec((Bt, N, F), lambda s: (s, 0, 0)),
                # Fused emb@W table, resident (constant index_map).
                pl.BlockSpec((C, F), lambda s: (0, 0)),
            ],
            # Lane-dense output block: lane dim = Bt (128 by default).
            out_specs=pl.BlockSpec((1, N, Bt), lambda s: (s, 0, 0)),
        ),
        compiler_params=pltpu.CompilerParams(
            dimension_semantics=("parallel",),
            vmem_limit_bytes=32 * 1024 * 1024,
        ),
    )(ids, x, embw)

    # (num_steps, N, Bt) -> (B, N): wrapper-side layout plumbing only.
    return out.transpose(0, 2, 1).reshape(Bp, N)[:B]


def receiver_reference(x, sender_out, w, b, emb):
    imgs = jnp.einsum("bnf,ef->bne", x, w) + b          # Linear per candidate (with bias)
    h_s = emb[sender_out]                               # (B, E)
    h = jnp.einsum("bne,be->bn", imgs, h_s)             # bmm + squeeze
    return jax.nn.log_softmax(h, axis=1)


if __name__ == "__main__":
    # Shapes consistent with the module: B batches, N candidate images,
    # feat_dim features, embed_dim hidden, num_classes vocabulary.
    B, N, FEAT, EMBED, NUM_CLASSES = 256, 8, 16, 32, 10

    key = jax.random.PRNGKey(0)
    k_x, k_w, k_b, k_e, k_s = jax.random.split(key, 5)

    x = jax.random.normal(k_x, (B, N, FEAT), dtype=jnp.float32)
    sender_out = jax.random.randint(k_s, (B,), 0, NUM_CLASSES, dtype=jnp.int32)

    # Deterministic parameter init (shapes from nn.Linear / nn.Embedding).
    w_feat = jax.random.normal(k_w, (EMBED, FEAT), dtype=jnp.float32) * 0.1
    b_feat = jax.random.normal(k_b, (EMBED,), dtype=jnp.float32) * 0.1
    emb_table = jax.random.normal(k_e, (NUM_CLASSES, EMBED), dtype=jnp.float32)

    # Main case: 2 grid steps of Bt=128 batch rows (even step count so v7x's
    # two TensorCores split the "parallel" axis; full 128-lane output stores).
    out = receiver_forward(x, sender_out, w_feat, b_feat, emb_table, block_b=128)
    out = jax.block_until_ready(out)
    ref = receiver_reference(x, sender_out, w_feat, b_feat, emb_table)
    assert out.shape == (B, N), out.shape
    assert jnp.allclose(out, ref, atol=1e-4, rtol=1e-4), (out, ref)

    # Ragged case: B not a multiple of 8 / of the tile (exercises padding path).
    Bs = 37
    out_s = receiver_forward(x[:Bs], sender_out[:Bs], w_feat, b_feat, emb_table, block_b=128)
    out_s = jax.block_until_ready(out_s)
    ref_s = receiver_reference(x[:Bs], sender_out[:Bs], w_feat, b_feat, emb_table)
    assert out_s.shape == (Bs, N), out_s.shape
    assert jnp.allclose(out_s, ref_s, atol=1e-4, rtol=1e-4), (out_s, ref_s)

    print("KERNEL_OK")
</pallas_src>

<mosaic_0001>
module attributes {stable_mosaic.version = 11 : i64} {
  func.func @receiver_kernel(%arg0: i32, %arg1: memref<2x128x1xi32, #tpu.memory_space<vmem>>, %arg2: memref<128x8x16xf32, #tpu.memory_space<vmem>>, %arg3: memref<10x16xf32, #tpu.memory_space<vmem>>, %arg4: memref<1x8x128xf32, #tpu.memory_space<vmem>>) attributes {dimension_semantics = [#tpu.dimension_semantics<parallel>], iteration_bounds = array<i64: 2>, scalar_prefetch = 0 : i64, scratch_operands = 0 : i64, tpu.core_type = #tpu.core_type<tc>, window_params = [{pipeline_mode = #tpu.pipeline_mode<synchronous>, transform_indices = @transform_0, window_bounds = array<i64: 2, 128, 1>}, {transform_indices = @transform_1, window_bounds = array<i64: 128, 8, 16>}, {pipeline_mode = #tpu.pipeline_mode<synchronous>, transform_indices = @transform_2, window_bounds = array<i64: 10, 16>}, {transform_indices = @transform_3, window_bounds = array<i64: 1, 8, 128>}]} {
    %0 = arith.index_cast %arg0 : i32 to index
    %c0 = arith.constant 0 : index
    %c0_0 = arith.constant 0 : index
    %1 = vector.load %arg1[%0, %c0, %c0_0] : memref<2x128x1xi32, #tpu.memory_space<vmem>>, vector<1x128x1xi32>
    %2 = vector.shape_cast %1 : vector<1x128x1xi32> to vector<128x1xi32>
    %3 = tpu.iota {dimensions = array<i32: 1>} : vector<128x10xi32>
    %4 = vector.broadcast %2 : vector<128x1xi32> to vector<128x10xi32>
    %5 = arith.cmpi eq, %4, %3 : vector<128x10xi32>
    %6 = arith.extui %5 : vector<128x10xi1> to vector<128x10xi32>
    %7 = arith.sitofp %6 : vector<128x10xi32> to vector<128x10xf32>
    %c0_1 = arith.constant 0 : index
    %c0_2 = arith.constant 0 : index
    %8 = vector.load %arg3[%c0_1, %c0_2] : memref<10x16xf32, #tpu.memory_space<vmem>>, vector<10x16xf32>
    %cst = arith.constant dense<0.000000e+00> : vector<128x16xf32>
    %9 = tpu.matmul %7, %8, %cst {dimension_numbers = #tpu.dot_dimension_numbers<[1], [0], [0], [1], [0, 0, 1, 1], [], []>} : vector<128x10xf32>, vector<10x16xf32>, vector<128x16xf32> -> vector<128x16xf32>
    %c0_3 = arith.constant 0 : index
    %c0_4 = arith.constant 0 : index
    %c0_5 = arith.constant 0 : index
    %10 = vector.load %arg2[%c0_3, %c0_4, %c0_5] : memref<128x8x16xf32, #tpu.memory_space<vmem>>, vector<128x8x16xf32>
    %11 = vector.shape_cast %9 : vector<128x16xf32> to vector<128x1x16xf32>
    %12 = vector.broadcast %11 : vector<128x1x16xf32> to vector<128x8x16xf32>
    %13 = arith.mulf %10, %12 : vector<128x8x16xf32>
    %cst_6 = arith.constant dense<0.000000e+00> : vector<128x8xf32>
    %14 = vector.multi_reduction <add>, %13, %cst_6 [2] : vector<128x8x16xf32> to vector<128x8xf32>
    %15 = tpu.transpose %14, [1, 0] : vector<128x8xf32> -> vector<8x128xf32>
    %cst_7 = arith.constant dense<0xFF800000> : vector<128xf32>
    %16 = vector.multi_reduction <maximumf>, %15, %cst_7 [0] : vector<8x128xf32> to vector<128xf32>
    %17 = vector.shape_cast %16 : vector<128xf32> to vector<1x128xf32>
    %18 = vector.broadcast %17 : vector<1x128xf32> to vector<8x128xf32>
    %19 = arith.subf %15, %18 : vector<8x128xf32>
    %20 = math.exp %19 : vector<8x128xf32>
    %cst_8 = arith.constant dense<0.000000e+00> : vector<128xf32>
    %21 = vector.multi_reduction <add>, %20, %cst_8 [0] : vector<8x128xf32> to vector<128xf32>
    %22 = vector.shape_cast %21 : vector<128xf32> to vector<1x128xf32>
    %23 = math.log %22 : vector<1x128xf32>
    %24 = vector.broadcast %23 : vector<1x128xf32> to vector<8x128xf32>
    %25 = arith.subf %19, %24 : vector<8x128xf32>
    %c0_9 = arith.constant 0 : index
    %c0_10 = arith.constant 0 : index
    %c0_11 = arith.constant 0 : index
    %26 = vector.load %arg4[%c0_9, %c0_10, %c0_11] : memref<1x8x128xf32, #tpu.memory_space<vmem>>, vector<1x8x128xf32>
    %27 = vector.shape_cast %26 : vector<1x8x128xf32> to vector<8x128xf32>
    %28 = vector.shape_cast %25 : vector<8x128xf32> to vector<1x8x128xf32>
    tpu.vector_store %arg4[%c0_9, %c0_10, %c0_11], %28 {strides = array<i32>} : memref<1x8x128xf32, #tpu.memory_space<vmem>>, vector<1x8x128xf32>,
    return
  }
  func.func @transform_0(%arg0: i32) -> (i32, i32, i32) {
    %c0_i32 = arith.constant 0 : i32
    %c0_i32_0 = arith.constant 0 : i32
    %c0_i32_1 = arith.constant 0 : i32
    %c0_i32_2 = arith.constant 0 : i32
    return %c0_i32, %c0_i32_0, %c0_i32_1 : i32, i32, i32
  }
  func.func @transform_1(%arg0: i32) -> (i32, i32, i32) {
    %c0_i32 = arith.constant 0 : i32
    %c0_i32_0 = arith.constant 0 : i32
    %c0_i32_1 = arith.constant 0 : i32
    return %arg0, %c0_i32, %c0_i32_0 : i32, i32, i32
  }
  func.func @transform_2(%arg0: i32) -> (i32, i32) {
    %c0_i32 = arith.constant 0 : i32
    %c0_i32_0 = arith.constant 0 : i32
    %c0_i32_1 = arith.constant 0 : i32
    return %c0_i32, %c0_i32_0 : i32, i32
  }
  func.func @transform_3(%arg0: i32) -> (i32, i32, i32) {
    %c0_i32 = arith.constant 0 : i32
    %c0_i32_0 = arith.constant 0 : i32
    %c0_i32_1 = arith.constant 0 : i32
    return %arg0, %c0_i32, %c0_i32_0 : i32, i32, i32
  }
}

</mosaic_0001>

<llo_original>
// kernel: tpu_custom_call.1
$region0: #{tpu_custom_call.1}
  #allocation0 [shape = 'u32[]', space=smem, size = 0x4, offset = 0x4, fixed_abs, tag = 'smem constant byte address 0x4 - core index']
  #allocation1 [shape = 'u32[144,128]{1,0:T(1,128)}', space=vmem, size = 0x12000, scoped, tag = 'internal scratch']
  %s0 = inlined_call_operand.vmem [shape: s32[2,128,1], index: 0, kind: input, shape index: {}]
  %s1 = inlined_call_operand.vmem [shape: f32[256,8,16], index: 1, kind: input, shape index: {}]
  %s2 = inlined_call_operand.vmem [shape: f32[10,16], index: 2, kind: input, shape index: {}]
  %s3 = inlined_call_operand.hbm [shape: f32[2,8,128], index: 3, kind: output, shape index: {}]
  %s4 = sld [smem:[#allocation0]]
  $region45: #{tpu_custom_call.1} parent=0
    _
  %s6 = ssub.s32 1, %s4
  %s7 = scalar_select 0, %s6, %s4
  $region1: #{tpu_custom_call.1} parent=0
    #allocation2 [shape = 'u8[8192]{0}', space=vmem, size = 0x2000, scoped, tag = 'output window, operand 0']
    #allocation3 [shape = 's32[2]{0}', space=sflag, size = 0x8, scoped, tag = 'scoped memory for tpu_custom_call.1']
    %8 = vsyncpa [#allocation3], 0
    %s9 = scalar_lea.sflag [#allocation3], 1
    %10 = vsyncpa %s9, 0
    loop: start=0, step=1, limit=4
    $region2: #{tpu_custom_call.1} parent=1 // loop_pre_header
      _
    $region3: #{tpu_custom_call.1} parent=1 // loop_header
      %s12 = sphi 0, %s16
      %p13 = scmp.ge.s32.totalorder %s12, 4
      %s20 = sphi 0, %s20
      %s22 = sphi 0, %s20
      %s23 = sphi 0, %s22
      %s37 = sphi 0, %s23
      %s43 = sphi 0, %s45
      %s46 = sphi 0, %s43
      %s47 = sphi 0, %s46
      %s63 = sphi 0, %s47
      %s67 = sphi 0, %s67
      %s69 = sphi 0, %s67
      %s70 = sphi 0, %s69
      %s84 = sphi 0, %s70
      %s90 = sphi 0, %s92
      %s93 = sphi 0, %s90
      %s94 = sphi 0, %s93
      %s110 = sphi 0, %s94
    $region4: #{tpu_custom_call.1} parent=1 // loop_header_branch
      %15 = sbr.rel (%p13) target = $region8
    $region5: #{tpu_custom_call.1} parent=1 // loop_body
      %s17 = ssub.s32 %s12, 1
      %s18 = ssub.s32 %s12, 2
      %s19 = sadd.s32 %s12, 1
      %s21 = sadd.s32 %s20, 1
      %p24 = scmp.eq.s32.totalorder %s12, 1
      %p25 = scmp.ne.s32.totalorder %s20, %s22
      %p26 = scmp.eq.s32.totalorder %s12, 0
      %p27 = por %p25, %p26
      %p28 = scmp.ne.s32.totalorder %s20, %s22
      %p29 = scmp.eq.s32.totalorder %s17, 1
      %p30 = por %p28, %p29
      %p31 = scmp.ne.s32.totalorder %s22, %s23
      %p32 = scmp.eq.s32.totalorder %s17, 0
      %p33 = por %p31, %p32
      %p34 = scmp.ne.s32.totalorder %s22, %s23
      %p35 = scmp.eq.s32.totalorder %s18, 1
      %p36 = por %p34, %p35
      %p38 = scmp.ne.s32.totalorder %s23, %s37
      %p39 = scmp.eq.s32.totalorder %s18, 0
      %p40 = por %p38, %p39
      %s41 = ssub.s32 %s12, %s19
      %p42 = scmp.eq.s32.totalorder %s41, 0
      %s44 = sadd.s32 %s43, 1
      %s45 = scalar_select %p42, %s43, %s44
      %p48 = pneg %p42
      %p49 = scmp.eq.s32.totalorder %s12, 1
      %p50 = por %p48, %p49
      %p51 = scmp.ne.s32.totalorder %s43, %s46
      %p52 = scmp.eq.s32.totalorder %s12, 0
      %p53 = por %p51, %p52
      %p54 = scmp.ne.s32.totalorder %s43, %s46
      %p55 = scmp.eq.s32.totalorder %s17, 1
      %p56 = por %p54, %p55
      %p57 = scmp.ne.s32.totalorder %s46, %s47
      %p58 = scmp.eq.s32.totalorder %s17, 0
      %p59 = por %p57, %p58
      %p60 = scmp.ne.s32.totalorder %s46, %s47
      %p61 = scmp.eq.s32.totalorder %s18, 1
      %p62 = por %p60, %p61
      %p64 = scmp.ne.s32.totalorder %s47, %s63
      %p65 = scmp.eq.s32.totalorder %s18, 0
      %p66 = por %p64, %p65
      %s68 = sadd.s32 %s67, 1
      %p71 = scmp.eq.s32.totalorder %s12, 1
      %p72 = scmp.ne.s32.totalorder %s67, %s69
      %p73 = scmp.eq.s32.totalorder %s12, 0
      %p74 = por %p72, %p73
      %p75 = scmp.ne.s32.totalorder %s67, %s69
      %p76 = scmp.eq.s32.totalorder %s17, 1
      %p77 = por %p75, %p76
      %p78 = scmp.ne.s32.totalorder %s69, %s70
      %p79 = scmp.eq.s32.totalorder %s17, 0
      %p80 = por %p78, %p79
      %p81 = scmp.ne.s32.totalorder %s69, %s70
      %p82 = scmp.eq.s32.totalorder %s18, 1
      %p83 = por %p81, %p82
      %p85 = scmp.ne.s32.totalorder %s70, %s84
      %p86 = scmp.eq.s32.totalorder %s18, 0
      %p87 = por %p85, %p86
      %s88 = ssub.s32 %s12, %s19
      %p89 = scmp.eq.s32.totalorder %s88, 0
      %s91 = sadd.s32 %s90, 1
      %s92 = scalar_select %p89, %s90, %s91
      %p95 = pneg %p89
      %p96 = scmp.eq.s32.totalorder %s12, 1
      %p97 = por %p95, %p96
      %p98 = scmp.ne.s32.totalorder %s90, %s93
      %p99 = scmp.eq.s32.totalorder %s12, 0
      %p100 = por %p98, %p99
      %p101 = scmp.ne.s32.totalorder %s90, %s93
      %p102 = scmp.eq.s32.totalorder %s17, 1
      %p103 = por %p101, %p102
      %p104 = scmp.ne.s32.totalorder %s93, %s94
      %p105 = scmp.eq.s32.totalorder %s17, 0
      %p106 = por %p104, %p105
      %p107 = scmp.ne.s32.totalorder %s93, %s94
      %p108 = scmp.eq.s32.totalorder %s18, 1
      %p109 = por %p107, %p108
      %p111 = scmp.ne.s32.totalorder %s94, %s110
      %p112 = scmp.eq.s32.totalorder %s18, 0
      %p113 = por %p111, %p112
      %p114 = scmp.le.s32.totalorder 1, %s12
      %p115 = scmp.lt.s32.totalorder %s12, 3
      %p116 = pnand %p114, %p115
      %p117 = pneg %p116
      // Predicated region
      $region9: #{tpu_custom_call.1} parent=5 // pred_check
        _
      $region10: #{tpu_custom_call.1} parent=5 // pred_check_branch
        %119 = sbr.rel (%p116) target = $region12
      $region11: #{tpu_custom_call.1} parent=5 // pred_region
        %s120 = ssub.s32 %s12, 1
        // Predicated region
        $region13: #{tpu_custom_call.1} parent=11 // pred_check
          %p121 = pneg %p33
        $region14: #{tpu_custom_call.1} parent=11 // pred_check_branch
          %123 = sbr.rel (%p121) target = $region16
        $region15: #{tpu_custom_call.1} parent=11 // pred_region
          _
        $region16: #{tpu_custom_call.1} parent=11 // pred_fallthru
          _
        // Predicated region
        $region17: #{tpu_custom_call.1} parent=11 // pred_check
          %p124 = pneg %p80
        $region18: #{tpu_custom_call.1} parent=11 // pred_check_branch
          %126 = sbr.rel (%p124) target = $region20
        $region19: #{tpu_custom_call.1} parent=11 // pred_region
          _
        $region20: #{tpu_custom_call.1} parent=11 // pred_fallthru
          _
      $region12: #{tpu_custom_call.1} parent=5 // pred_fallthru
        _
      %p127 = scmp.lt.s32.totalorder %s12, 2
      // Predicated region
      $region21: #{tpu_custom_call.1} parent=5 // pred_check
        %p128 = pneg %p127
      $region22: #{tpu_custom_call.1} parent=5 // pred_check_branch
        %130 = sbr.rel (%p128) target = $region24
      $region23: #{tpu_custom_call.1} parent=5 // pred_region
        // Predicated region
        $region25: #{tpu_custom_call.1} parent=23 // pred_check
          %p131 = pneg %p53
        $region26: #{tpu_custom_call.1} parent=23 // pred_check_branch
          %133 = sbr.rel (%p131) target = $region28
        $region27: #{tpu_custom_call.1} parent=23 // pred_region
          %s134 = smul.u32 128, %s12
          %p135 = scmp.lt.s32.totalorder %s134, 255
          %s136 = scalar_select %p135, %s134, 255
          %s137 = smul.addr %s136, 8
          %s138 = scalar_lea.vmem %s1, %s137
          %s139 = smul.u32 128, %s12
        $region28: #{tpu_custom_call.1} parent=23 // pred_fallthru
          _
      $region24: #{tpu_custom_call.1} parent=5 // pred_fallthru
        _
      %p140 = scmp.le.s32.totalorder 1, %s12
      %p141 = scmp.lt.s32.totalorder %s12, 3
      %p142 = pnand %p140, %p141
      %p143 = pneg %p142
      // Predicated region
      $region29: #{tpu_custom_call.1} parent=5 // pred_check
        _
      $region30: #{tpu_custom_call.1} parent=5 // pred_check_branch
        %145 = sbr.rel (%p142) target = $region32
      $region31: #{tpu_custom_call.1} parent=5 // pred_region
        %s146 = ssub.s32 %s12, 1
        %p147 = pneg %p33
        %p148 = pneg %p30
        %s149 = smul.u32 128, %s17
        %p150 = scmp.lt.s32.totalorder %s149, 255
        %s151 = scalar_select %p150, %s149, 255
        %s152 = smul.addr %s151, 8
        %s153 = scalar_lea.vmem %s1, %s152
        %p154 = pneg %p59
        %p155 = pneg %p56
        %p156 = pneg %p80
        %p157 = pneg %p77
        %p158 = pneg %p106
        %p159 = pneg %p103
        %s160 = sand.u32 %s93, 1
        %s161 = scalar_lea.sflag [#allocation3], %s160
        %s162 = sand.u32 %s93, 1
        %s163 = smul.addr %s162, 8
        %s164 = scalar_lea.vmem [#allocation2], %s163
        %s165 = smul.u32 128, %s17
        %p166 = scmp.lt.s32.totalorder %s165, 255
        %s167 = scalar_select %p166, %s165, 255
        %s168 = smul.addr %s167, 8
        %s169 = scalar_lea.vmem %s1, %s168
        %s170 = smul.u32 128, %s17
        %s171 = smul.u32 %s17, 128
        %s172 = scalar_lea.vmem %s0, %s171
        %v173 = vld [vmem:[%s172] sm:$0xff]
        %v174 = vld [vmem:[%s172 + $0x8] sm:$0xff]
        %v175 = vld [vmem:[%s172 + $0x10] sm:$0xff]
        %v176 = vld [vmem:[%s172 + $0x18] sm:$0xff]
        %v177 = vld [vmem:[%s172 + $0x20] sm:$0xff]
        %v178 = vld [vmem:[%s172 + $0x28] sm:$0xff]
        %v179 = vld [vmem:[%s172 + $0x30] sm:$0xff]
        %v180 = vld [vmem:[%s172 + $0x38] sm:$0xff]
        %v181 = vld [vmem:[%s172 + $0x40] sm:$0xff]
        %v182 = vld [vmem:[%s172 + $0x48] sm:$0xff]
        %v183 = vld [vmem:[%s172 + $0x50] sm:$0xff]
        %v184 = vld [vmem:[%s172 + $0x58] sm:$0xff]
        %v185 = vld [vmem:[%s172 + $0x60] sm:$0xff]
        %v186 = vld [vmem:[%s172 + $0x68] sm:$0xff]
        %v187 = vld [vmem:[%s172 + $0x70] sm:$0xff]
        %v188 = vld [vmem:[%s172 + $0x78] sm:$0xff]
        %v189 = vlaneseq
        %v190 = vand.u32 %v189, 127
        %191 = vset.pattern.permute.xlu0 0
        %192 = vperm.xlu0 %191, %v173
        %v193 = vpop.permute.xlu0 %192
        %194 = vset.pattern.permute.xlu0 0
        %195 = vperm.xlu0 %194, %v174
        %v196 = vpop.permute.xlu0 %195
        %197 = vset.pattern.permute.xlu0 0
        %198 = vperm.xlu0 %197, %v175
        %v199 = vpop.permute.xlu0 %198
        %200 = vset.pattern.permute.xlu0 0
        %201 = vperm.xlu0 %200, %v176
        %v202 = vpop.permute.xlu0 %201
        %203 = vset.pattern.permute.xlu0 0
        %204 = vperm.xlu0 %203, %v177
        %v205 = vpop.permute.xlu0 %204
        %206 = vset.pattern.permute.xlu0 0
        %207 = vperm.xlu0 %206, %v178
        %v208 = vpop.permute.xlu0 %207
        %209 = vset.pattern.permute.xlu0 0
        %210 = vperm.xlu0 %209, %v179
        %v211 = vpop.permute.xlu0 %210
        %212 = vset.pattern.permute.xlu0 0
        %213 = vperm.xlu0 %212, %v180
        %v214 = vpop.permute.xlu0 %213
        %215 = vset.pattern.permute.xlu0 0
        %216 = vperm.xlu0 %215, %v181
        %v217 = vpop.permute.xlu0 %216
        %218 = vset.pattern.permute.xlu0 0
        %219 = vperm.xlu0 %218, %v182
        %v220 = vpop.permute.xlu0 %219
        %221 = vset.pattern.permute.xlu0 0
        %222 = vperm.xlu0 %221, %v183
        %v223 = vpop.permute.xlu0 %222
        %224 = vset.pattern.permute.xlu0 0
        %225 = vperm.xlu0 %224, %v184
        %v226 = vpop.permute.xlu0 %225
        %227 = vset.pattern.permute.xlu0 0
        %228 = vperm.xlu0 %227, %v185
        %v229 = vpop.permute.xlu0 %228
        %230 = vset.pattern.permute.xlu0 0
        %231 = vperm.xlu0 %230, %v186
        %v232 = vpop.permute.xlu0 %231
        %233 = vset.pattern.permute.xlu0 0
        %234 = vperm.xlu0 %233, %v187
        %v235 = vpop.permute.xlu0 %234
        %236 = vset.pattern.permute.xlu0 0
        %237 = vperm.xlu0 %236, %v188
        %v238 = vpop.permute.xlu0 %237
        %vm239 = vcmp.eq.s32.totalorder %v193, %v190
        %vm240 = vcmp.eq.s32.totalorder %v196, %v190
        %vm241 = vcmp.eq.s32.totalorder %v199, %v190
        %vm242 = vcmp.eq.s32.totalorder %v202, %v190
        %vm243 = vcmp.eq.s32.totalorder %v205, %v190
        %vm244 = vcmp.eq.s32.totalorder %v208, %v190
        %vm245 = vcmp.eq.s32.totalorder %v211, %v190
        %vm246 = vcmp.eq.s32.totalorder %v214, %v190
        %vm247 = vcmp.eq.s32.totalorder %v217, %v190
        %vm248 = vcmp.eq.s32.totalorder %v220, %v190
        %vm249 = vcmp.eq.s32.totalorder %v223, %v190
        %vm250 = vcmp.eq.s32.totalorder %v226, %v190
        %vm251 = vcmp.eq.s32.totalorder %v229, %v190
        %vm252 = vcmp.eq.s32.totalorder %v232, %v190
        %vm253 = vcmp.eq.s32.totalorder %v235, %v190
        %vm254 = vcmp.eq.s32.totalorder %v238, %v190
        %v255 = vsel %vm239, 1, 0
        %v256 = vsel %vm240, 1, 0
        %v257 = vsel %vm241, 1, 0
        %v258 = vsel %vm242, 1, 0
        %v259 = vsel %vm243, 1, 0
        %v260 = vsel %vm244, 1, 0
        %v261 = vsel %vm245, 1, 0
        %v262 = vsel %vm246, 1, 0
        %v263 = vsel %vm247, 1, 0
        %v264 = vsel %vm248, 1, 0
        %v265 = vsel %vm249, 1, 0
        %v266 = vsel %vm250, 1, 0
        %v267 = vsel %vm251, 1, 0
        %v268 = vsel %vm252, 1, 0
        %v269 = vsel %vm253, 1, 0
        %v270 = vsel %vm254, 1, 0
        %v271 = vcvt.s32.f32 %v255
        %v272 = vcvt.s32.f32 %v256
        %v273 = vcvt.s32.f32 %v257
        %v274 = vcvt.s32.f32 %v258
        %v275 = vcvt.s32.f32 %v259
        %v276 = vcvt.s32.f32 %v260
        %v277 = vcvt.s32.f32 %v261
        %v278 = vcvt.s32.f32 %v262
        %v279 = vcvt.s32.f32 %v263
        %v280 = vcvt.s32.f32 %v264
        %v281 = vcvt.s32.f32 %v265
        %v282 = vcvt.s32.f32 %v266
        %v283 = vcvt.s32.f32 %v267
        %v284 = vcvt.s32.f32 %v268
        %v285 = vcvt.s32.f32 %v269
        %v286 = vcvt.s32.f32 %v270
        %v287 = vld [vmem:[%s2] sm:$0xff]
        %v288 = vld [vmem:[%s2 + $0x8] sm:$0x3]
        %vm289 = vcmask 80896
        %v291 = vsel %vm289, %v271, 0
        %v294 = vsel %vm289, %v272, 0
        %v297 = vsel %vm289, %v273, 0
        %v300 = vsel %vm289, %v274, 0
        %v303 = vsel %vm289, %v275, 0
        %v306 = vsel %vm289, %v276, 0
        %v309 = vsel %vm289, %v277, 0
        %v312 = vsel %vm289, %v278, 0
        %v315 = vsel %vm289, %v279, 0
        %v318 = vsel %vm289, %v280, 0
        %v321 = vsel %vm289, %v281, 0
        %v324 = vsel %vm289, %v282, 0
        %v327 = vsel %vm289, %v283, 0
        %v330 = vsel %vm289, %v284, 0
        %v333 = vsel %vm289, %v285, 0
        %v336 = vsel %vm289, %v286, 0
        %vm338 = vcmask 1041408
        %v340 = vsel %vm338, %v288, 0
        %342 = vmatprep.subr.mxu0 0.0
        %343 = vmatpush1.msra.mxu0 %v287
        %344 = vmatprep.subr.mxu0 0.0
        %345 = vmatpush1.msra.mxu0 %v340
        %346 = vmatprep.subr.mxu0 0.0
        %347 = vmatpush1.msra.mxu0 0.0
        %348 = vmatprep.subr.mxu0 0.0
        %349 = vmatpush1.msra.mxu0 0.0
        %350 = vmatprep.subr.mxu0 0.0
        %351 = vmatpush1.msra.mxu0 0.0
        %352 = vmatprep.subr.mxu0 0.0
        %353 = vmatpush1.msra.mxu0 0.0
        %354 = vmatprep.subr.mxu0 0.0
        %355 = vmatpush1.msra.mxu0 0.0
        %356 = vmatprep.subr.mxu0 0.0
        %357 = vmatpush1.msra.mxu0 0.0
        %358 = vmatprep.subr.mxu0 0.0
        %359 = vmatpush1.msra.mxu0 0.0
        %360 = vmatprep.subr.mxu0 0.0
        %361 = vmatpush1.msra.mxu0 0.0
        %362 = vmatprep.subr.mxu0 0.0
        %363 = vmatpush1.msra.mxu0 0.0
        %364 = vmatprep.subr.mxu0 0.0
        %365 = vmatpush1.msra.mxu0 0.0
        %366 = vmatprep.subr.mxu0 0.0
        %367 = vmatpush1.msra.mxu0 0.0
        %368 = vmatprep.subr.mxu0 0.0
        %369 = vmatpush1.msra.mxu0 0.0
        %370 = vmatprep.subr.mxu0 0.0
        %371 = vmatpush1.msra.mxu0 0.0
        %372 = vmatprep.subr.mxu0 0.0
        %373 = vmatpush1.msra.mxu0 0.0
        %374 = vmatprep.subr.mxu0 0.0
        %375 = vmatpush1.msra.mxu0 0.0
        %376 = vmatprep.subr.mxu0 0.0
        %377 = vmatpush1.msra.mxu0 0.0
        %378 = vmatprep.subr.mxu0 0.0
        %379 = vmatpush1.msra.mxu0 0.0
        %380 = vmatprep.subr.mxu0 0.0
        %381 = vmatpush1.msra.mxu0 0.0
        %382 = vmatprep.subr.mxu0 0.0
        %383 = vmatpush1.msra.mxu0 0.0
        %384 = vmatprep.subr.mxu0 0.0
        %385 = vmatpush1.msra.mxu0 0.0
        %386 = vmatprep.subr.mxu0 0.0
        %387 = vmatpush1.msra.mxu0 0.0
        %388 = vmatprep.subr.mxu0 0.0
        %389 = vmatpush1.msra.mxu0 0.0
        %390 = vmatprep.subr.mxu0 0.0
        %391 = vmatpush1.msra.mxu0 0.0
        %392 = vmatprep.subr.mxu0 0.0
        %393 = vmatpush1.msra.mxu0 0.0
        %394 = vmatprep.subr.mxu0 0.0
        %395 = vmatpush1.msra.mxu0 0.0
        %396 = vmatprep.subr.mxu0 0.0
        %397 = vmatpush1.msra.mxu0 0.0
        %398 = vmatprep.subr.mxu0 0.0
        %399 = vmatpush1.msra.mxu0 0.0
        %400 = vmatprep.subr.mxu0 0.0
        %401 = vmatpush1.msra.mxu0 0.0
        %402 = vmatprep.subr.mxu0 0.0
        %403 = vmatpush1.msra.mxu0 0.0
        %404 = vmatprep.subr.mxu0 0.0
        %405 = vmatpush1.msra.mxu0 0.0
        %406 = vmatprep.mubr.f32.mxu0 0.0
        %407 = vmatmul.mubr.f32.gmra.mrb[0].mxu0 %v291
        %v408 = vpop.f32.mrb[0].mxu0
        %v409 = vadd.f32 0.0, %v408
        %v410 = vpop.f32.mrb[0].mxu0
        %411 = vmatprep.mubr.f32.mxu0 0.0
        %412 = vmatmul.mubr.f32.gmra.mrb[0].mxu0 %v294
        %v413 = vpop.f32.mrb[0].mxu0
        %v414 = vadd.f32 0.0, %v413
        %v415 = vpop.f32.mrb[0].mxu0
        %416 = vmatprep.mubr.f32.mxu0 0.0
        %417 = vmatmul.mubr.f32.gmra.mrb[0].mxu0 %v297
        %v418 = vpop.f32.mrb[0].mxu0
        %v419 = vadd.f32 0.0, %v418
        %v420 = vpop.f32.mrb[0].mxu0
        %421 = vmatprep.mubr.f32.mxu0 0.0
        %422 = vmatmul.mubr.f32.gmra.mrb[0].mxu0 %v300
        %v423 = vpop.f32.mrb[0].mxu0
        %v424 = vadd.f32 0.0, %v423
        %v425 = vpop.f32.mrb[0].mxu0
        %426 = vmatprep.mubr.f32.mxu0 0.0
        %427 = vmatmul.mubr.f32.gmra.mrb[0].mxu0 %v303
        %v428 = vpop.f32.mrb[0].mxu0
        %v429 = vadd.f32 0.0, %v428
        %v430 = vpop.f32.mrb[0].mxu0
        %431 = vmatprep.mubr.f32.mxu0 0.0
        %432 = vmatmul.mubr.f32.gmra.mrb[0].mxu0 %v306
        %v433 = vpop.f32.mrb[0].mxu0
        %v434 = vadd.f32 0.0, %v433
        %v435 = vpop.f32.mrb[0].mxu0
        %436 = vmatprep.mubr.f32.mxu0 0.0
        %437 = vmatmul.mubr.f32.gmra.mrb[0].mxu0 %v309
        %v438 = vpop.f32.mrb[0].mxu0
        %v439 = vadd.f32 0.0, %v438
        %v440 = vpop.f32.mrb[0].mxu0
        %441 = vmatprep.mubr.f32.mxu0 0.0
        %442 = vmatmul.mubr.f32.gmra.mrb[0].mxu0 %v312
        %v443 = vpop.f32.mrb[0].mxu0
        %v444 = vadd.f32 0.0, %v443
        %v445 = vpop.f32.mrb[0].mxu0
        %446 = vmatprep.mubr.f32.mxu0 0.0
        %447 = vmatmul.mubr.f32.gmra.mrb[0].mxu0 %v315
        %v448 = vpop.f32.mrb[0].mxu0
        %v449 = vadd.f32 0.0, %v448
        %v450 = vpop.f32.mrb[0].mxu0
        %451 = vmatprep.mubr.f32.mxu0 0.0
        %452 = vmatmul.mubr.f32.gmra.mrb[0].mxu0 %v318
        %v453 = vpop.f32.mrb[0].mxu0
        %v454 = vadd.f32 0.0, %v453
        %v455 = vpop.f32.mrb[0].mxu0
        %456 = vmatprep.mubr.f32.mxu0 0.0
        %457 = vmatmul.mubr.f32.gmra.mrb[0].mxu0 %v321
        %v458 = vpop.f32.mrb[0].mxu0
        %v459 = vadd.f32 0.0, %v458
        %v460 = vpop.f32.mrb[0].mxu0
        %461 = vmatprep.mubr.f32.mxu0 0.0
        %462 = vmatmul.mubr.f32.gmra.mrb[0].mxu0 %v324
        %v463 = vpop.f32.mrb[0].mxu0
        %v464 = vadd.f32 0.0, %v463
        %v465 = vpop.f32.mrb[0].mxu0
        %466 = vmatprep.mubr.f32.mxu0 0.0
        %467 = vmatmul.mubr.f32.gmra.mrb[0].mxu0 %v327
        %v468 = vpop.f32.mrb[0].mxu0
        %v469 = vadd.f32 0.0, %v468
        %v470 = vpop.f32.mrb[0].mxu0
        %471 = vmatprep.mubr.f32.mxu0 0.0
        %472 = vmatmul.mubr.f32.gmra.mrb[0].mxu0 %v330
        %v473 = vpop.f32.mrb[0].mxu0
        %v474 = vadd.f32 0.0, %v473
        %v475 = vpop.f32.mrb[0].mxu0
        %476 = vmatprep.mubr.f32.mxu0 0.0
        %477 = vmatmul.mubr.f32.gmra.mrb[0].mxu0 %v333
        %v478 = vpop.f32.mrb[0].mxu0
        %v479 = vadd.f32 0.0, %v478
        %v480 = vpop.f32.mrb[0].mxu0
        %481 = vmatprep.mubr.f32.mxu0 0.0
        %482 = vmatmul.mubr.f32.gmra.mrb[0].mxu0 %v336
        %v483 = vpop.f32.mrb[0].mxu0
        %v484 = vadd.f32 0.0, %v483
        %v485 = vpop.f32.mrb[0].mxu0
        %486 = vdwg.mxu0
        %v487 = vld [vmem:[%s169] sm:$0xff]
        %v488 = vld [vmem:[%s169 + $0x8] sm:$0xff]
        %v489 = vld [vmem:[%s169 + $0x10] sm:$0xff]
        %v490 = vld [vmem:[%s169 + $0x18] sm:$0xff]
        %v491 = vld [vmem:[%s169 + $0x20] sm:$0xff]
        %v492 = vld [vmem:[%s169 + $0x28] sm:$0xff]
        %v493 = vld [vmem:[%s169 + $0x30] sm:$0xff]
        %v494 = vld [vmem:[%s169 + $0x38] sm:$0xff]
        %v495 = vld [vmem:[%s169 + $0x40] sm:$0xff]
        %v496 = vld [vmem:[%s169 + $0x48] sm:$0xff]
        %v497 = vld [vmem:[%s169 + $0x50] sm:$0xff]
        %v498 = vld [vmem:[%s169 + $0x58] sm:$0xff]
        %v499 = vld [vmem:[%s169 + $0x60] sm:$0xff]
        %v500 = vld [vmem:[%s169 + $0x68] sm:$0xff]
        %v501 = vld [vmem:[%s169 + $0x70] sm:$0xff]
        %v502 = vld [vmem:[%s169 + $0x78] sm:$0xff]
        %v503 = vld [vmem:[%s169 + $0x80] sm:$0xff]
        %v504 = vld [vmem:[%s169 + $0x88] sm:$0xff]
        %v505 = vld [vmem:[%s169 + $0x90] sm:$0xff]
        %v506 = vld [vmem:[%s169 + $0x98] sm:$0xff]
        %v507 = vld [vmem:[%s169 + $0xa0] sm:$0xff]
        %v508 = vld [vmem:[%s169 + $0xa8] sm:$0xff]
        %v509 = vld [vmem:[%s169 + $0xb0] sm:$0xff]
        %v510 = vld [vmem:[%s169 + $0xb8] sm:$0xff]
        %v511 = vld [vmem:[%s169 + $0xc0] sm:$0xff]
        %v512 = vld [vmem:[%s169 + $0xc8] sm:$0xff]
        %v513 = vld [vmem:[%s169 + $0xd0] sm:$0xff]
        %v514 = vld [vmem:[%s169 + $0xd8] sm:$0xff]
        %v515 = vld [vmem:[%s169 + $0xe0] sm:$0xff]
        %v516 = vld [vmem:[%s169 + $0xe8] sm:$0xff]
        %v517 = vld [vmem:[%s169 + $0xf0] sm:$0xff]
        %v518 = vld [vmem:[%s169 + $0xf8] sm:$0xff]
        %v519 = vld [vmem:[%s169 + $0x100] sm:$0xff]
        %v520 = vld [vmem:[%s169 + $0x108] sm:$0xff]
        %v521 = vld [vmem:[%s169 + $0x110] sm:$0xff]
        %v522 = vld [vmem:[%s169 + $0x118] sm:$0xff]
        %v523 = vld [vmem:[%s169 + $0x120] sm:$0xff]
        %v524 = vld [vmem:[%s169 + $0x128] sm:$0xff]
        %v525 = vld [vmem:[%s169 + $0x130] sm:$0xff]
        %v526 = vld [vmem:[%s169 + $0x138] sm:$0xff]
        %v527 = vld [vmem:[%s169 + $0x140] sm:$0xff]
        %v528 = vld [vmem:[%s169 + $0x148] sm:$0xff]
        %v529 = vld [vmem:[%s169 + $0x150] sm:$0xff]
        %v530 = vld [vmem:[%s169 + $0x158] sm:$0xff]
        %v531 = vld [vmem:[%s169 + $0x160] sm:$0xff]
        %v532 = vld [vmem:[%s169 + $0x168] sm:$0xff]
        %v533 = vld [vmem:[%s169 + $0x170] sm:$0xff]
        %v534 = vld [vmem:[%s169 + $0x178] sm:$0xff]
        %v535 = vld [vmem:[%s169 + $0x180] sm:$0xff]
        %v536 = vld [vmem:[%s169 + $0x188] sm:$0xff]
        %v537 = vld [vmem:[%s169 + $0x190] sm:$0xff]
        %v538 = vld [vmem:[%s169 + $0x198] sm:$0xff]
        %v539 = vld [vmem:[%s169 + $0x1a0] sm:$0xff]
        %v540 = vld [vmem:[%s169 + $0x1a8] sm:$0xff]
        %v541 = vld [vmem:[%s169 + $0x1b0] sm:$0xff]
        %v542 = vld [vmem:[%s169 + $0x1b8] sm:$0xff]
        %v543 = vld [vmem:[%s169 + $0x1c0] sm:$0xff]
        %v544 = vld [vmem:[%s169 + $0x1c8] sm:$0xff]
        %v545 = vld [vmem:[%s169 + $0x1d0] sm:$0xff]
        %v546 = vld [vmem:[%s169 + $0x1d8] sm:$0xff]
        %v547 = vld [vmem:[%s169 + $0x1e0] sm:$0xff]
        %v548 = vld [vmem:[%s169 + $0x1e8] sm:$0xff]
        %v549 = vld [vmem:[%s169 + $0x1f0] sm:$0xff]
        %v550 = vld [vmem:[%s169 + $0x1f8] sm:$0xff]
        %v551 = vld [vmem:[%s169 + $0x200] sm:$0xff]
        %v552 = vld [vmem:[%s169 + $0x208] sm:$0xff]
        %v553 = vld [vmem:[%s169 + $0x210] sm:$0xff]
        %v554 = vld [vmem:[%s169 + $0x218] sm:$0xff]
        %v555 = vld [vmem:[%s169 + $0x220] sm:$0xff]
        %v556 = vld [vmem:[%s169 + $0x228] sm:$0xff]
        %v557 = vld [vmem:[%s169 + $0x230] sm:$0xff]
        %v558 = vld [vmem:[%s169 + $0x238] sm:$0xff]
        %v559 = vld [vmem:[%s169 + $0x240] sm:$0xff]
        %v560 = vld [vmem:[%s169 + $0x248] sm:$0xff]
        %v561 = vld [vmem:[%s169 + $0x250] sm:$0xff]
        %v562 = vld [vmem:[%s169 + $0x258] sm:$0xff]
        %v563 = vld [vmem:[%s169 + $0x260] sm:$0xff]
        %v564 = vld [vmem:[%s169 + $0x268] sm:$0xff]
        %v565 = vld [vmem:[%s169 + $0x270] sm:$0xff]
        %v566 = vld [vmem:[%s169 + $0x278] sm:$0xff]
        %v567 = vld [vmem:[%s169 + $0x280] sm:$0xff]
        %v568 = vld [vmem:[%s169 + $0x288] sm:$0xff]
        %v569 = vld [vmem:[%s169 + $0x290] sm:$0xff]
        %v570 = vld [vmem:[%s169 + $0x298] sm:$0xff]
        %v571 = vld [vmem:[%s169 + $0x2a0] sm:$0xff]
        %v572 = vld [vmem:[%s169 + $0x2a8] sm:$0xff]
        %v573 = vld [vmem:[%s169 + $0x2b0] sm:$0xff]
        %v574 = vld [vmem:[%s169 + $0x2b8] sm:$0xff]
        %v575 = vld [vmem:[%s169 + $0x2c0] sm:$0xff]
        %v576 = vld [vmem:[%s169 + $0x2c8] sm:$0xff]
        %v577 = vld [vmem:[%s169 + $0x2d0] sm:$0xff]
        %v578 = vld [vmem:[%s169 + $0x2d8] sm:$0xff]
        %v579 = vld [vmem:[%s169 + $0x2e0] sm:$0xff]
        %v580 = vld [vmem:[%s169 + $0x2e8] sm:$0xff]
        %v581 = vld [vmem:[%s169 + $0x2f0] sm:$0xff]
        %v582 = vld [vmem:[%s169 + $0x2f8] sm:$0xff]
        %v583 = vld [vmem:[%s169 + $0x300] sm:$0xff]
        %v584 = vld [vmem:[%s169 + $0x308] sm:$0xff]
        %v585 = vld [vmem:[%s169 + $0x310] sm:$0xff]
        %v586 = vld [vmem:[%s169 + $0x318] sm:$0xff]
        %v587 = vld [vmem:[%s169 + $0x320] sm:$0xff]
        %v588 = vld [vmem:[%s169 + $0x328] sm:$0xff]
        %v589 = vld [vmem:[%s169 + $0x330] sm:$0xff]
        %v590 = vld [vmem:[%s169 + $0x338] sm:$0xff]
        %v591 = vld [vmem:[%s169 + $0x340] sm:$0xff]
        %v592 = vld [vmem:[%s169 + $0x348] sm:$0xff]
        %v593 = vld [vmem:[%s169 + $0x350] sm:$0xff]
        %v594 = vld [vmem:[%s169 + $0x358] sm:$0xff]
        %v595 = vld [vmem:[%s169 + $0x360] sm:$0xff]
        %v596 = vld [vmem:[%s169 + $0x368] sm:$0xff]
        %v597 = vld [vmem:[%s169 + $0x370] sm:$0xff]
        %v598 = vld [vmem:[%s169 + $0x378] sm:$0xff]
        %v599 = vld [vmem:[%s169 + $0x380] sm:$0xff]
        %v600 = vld [vmem:[%s169 + $0x388] sm:$0xff]
        %v601 = vld [vmem:[%s169 + $0x390] sm:$0xff]
        %v602 = vld [vmem:[%s169 + $0x398] sm:$0xff]
        %v603 = vld [vmem:[%s169 + $0x3a0] sm:$0xff]
        %v604 = vld [vmem:[%s169 + $0x3a8] sm:$0xff]
        %v605 = vld [vmem:[%s169 + $0x3b0] sm:$0xff]
        %v606 = vld [vmem:[%s169 + $0x3b8] sm:$0xff]
        %v607 = vld [vmem:[%s169 + $0x3c0] sm:$0xff]
        %v608 = vld [vmem:[%s169 + $0x3c8] sm:$0xff]
        %v609 = vld [vmem:[%s169 + $0x3d0] sm:$0xff]
        %v610 = vld [vmem:[%s169 + $0x3d8] sm:$0xff]
        %v611 = vld [vmem:[%s169 + $0x3e0] sm:$0xff]
        %v612 = vld [vmem:[%s169 + $0x3e8] sm:$0xff]
        %v613 = vld [vmem:[%s169 + $0x3f0] sm:$0xff]
        %v614 = vld [vmem:[%s169 + $0x3f8] sm:$0xff]
        %v631 = vcombine.high %v409, %v409
        %v633 = vunpack.c.l.s4 1966171168
        %v634 = vunpack.c.0.s8 %v633
        %v635 = vlaneseq
        %v636 = vshrl.u32 %v635, 7
        %v637 = vsub.s32 %v634, %v636
        %v638 = vrot.slane %v409, %v637
        %v640 = vunpack.c.l.s4 1966171168
        %v641 = vunpack.c.0.s8 %v640
        %v642 = vlaneseq
        %v643 = vshrl.u32 %v642, 7
        %v644 = vsub.s32 %v641, %v643
        %v645 = vrot.slane %v631, %v644
        %v646 = vcombine.high %v638, %v638
        %v647 = vcombine.high %v645, %v645
        %v649 = vunpack.c.l.s4 1966171168
        %v650 = vunpack.c.0.s8 %v649
        %v651 = vlaneseq
        %v652 = vshrl.u32 %v651, 7
        %v653 = vsub.s32 %v650, %v652
        %v654 = vrot.slane %v638, %v653
        %v656 = vunpack.c.l.s4 1966171168
        %v657 = vunpack.c.0.s8 %v656
        %v658 = vlaneseq
        %v659 = vshrl.u32 %v658, 7
        %v660 = vsub.s32 %v657, %v659
        %v661 = vrot.slane %v645, %v660
        %v663 = vunpack.c.l.s4 1966171168
        %v664 = vunpack.c.0.s8 %v663
        %v665 = vlaneseq
        %v666 = vshrl.u32 %v665, 7
        %v667 = vsub.s32 %v664, %v666
        %v668 = vrot.slane %v646, %v667
        %v670 = vunpack.c.l.s4 1966171168
        %v671 = vunpack.c.0.s8 %v670
        %v672 = vlaneseq
        %v673 = vshrl.u32 %v672, 7
        %v674 = vsub.s32 %v671, %v673
        %v675 = vrot.slane %v647, %v674
        %v676 = vcombine.high %v654, %v654
        %v677 = vcombine.high %v661, %v661
        %v678 = vcombine.high %v668, %v668
        %v679 = vcombine.high %v675, %v675
        %v680 = vcombine.high %v414, %v414
        %v682 = vunpack.c.l.s4 1966171168
        %v683 = vunpack.c.0.s8 %v682
        %v684 = vlaneseq
        %v685 = vshrl.u32 %v684, 7
        %v686 = vsub.s32 %v683, %v685
        %v687 = vrot.slane %v414, %v686
        %v689 = vunpack.c.l.s4 1966171168
        %v690 = vunpack.c.0.s8 %v689
        %v691 = vlaneseq
        %v692 = vshrl.u32 %v691, 7
        %v693 = vsub.s32 %v690, %v692
        %v694 = vrot.slane %v680, %v693
        %v695 = vcombine.high %v687, %v687
        %v696 = vcombine.high %v694, %v694
        %v698 = vunpack.c.l.s4 1966171168
        %v699 = vunpack.c.0.s8 %v698
        %v700 = vlaneseq
        %v701 = vshrl.u32 %v700, 7
        %v702 = vsub.s32 %v699, %v701
        %v703 = vrot.slane %v687, %v702
        %v705 = vunpack.c.l.s4 1966171168
        %v706 = vunpack.c.0.s8 %v705
        %v707 = vlaneseq
        %v708 = vshrl.u32 %v707, 7
        %v709 = vsub.s32 %v706, %v708
        %v710 = vrot.slane %v694, %v709
        %v712 = vunpack.c.l.s4 1966171168
        %v713 = vunpack.c.0.s8 %v712
        %v714 = vlaneseq
        %v715 = vshrl.u32 %v714, 7
        %v716 = vsub.s32 %v713, %v715
        %v717 = vrot.slane %v695, %v716
        %v719 = vunpack.c.l.s4 1966171168
        %v720 = vunpack.c.0.s8 %v719
        %v721 = vlaneseq
        %v722 = vshrl.u32 %v721, 7
        %v723 = vsub.s32 %v720, %v722
        %v724 = vrot.slane %v696, %v723
        %v725 = vcombine.high %v703, %v703
        %v726 = vcombine.high %v710, %v710
        %v727 = vcombine.high %v717, %v717
        %v728 = vcombine.high %v724, %v724
        %v729 = vcombine.high %v419, %v419
        %v731 = vunpack.c.l.s4 1966171168
        %v732 = vunpack.c.0.s8 %v731
        %v733 = vlaneseq
        %v734 = vshrl.u32 %v733, 7
        %v735 = vsub.s32 %v732, %v734
        %v736 = vrot.slane %v419, %v735
        %v738 = vunpack.c.l.s4 1966171168
        %v739 = vunpack.c.0.s8 %v738
        %v740 = vlaneseq
        %v741 = vshrl.u32 %v740, 7
        %v742 = vsub.s32 %v739, %v741
        %v743 = vrot.slane %v729, %v742
        %v744 = vcombine.high %v736, %v736
        %v745 = vcombine.high %v743, %v743
        %v747 = vunpack.c.l.s4 1966171168
        %v748 = vunpack.c.0.s8 %v747
        %v749 = vlaneseq
        %v750 = vshrl.u32 %v749, 7
        %v751 = vsub.s32 %v748, %v750
        %v752 = vrot.slane %v736, %v751
        %v754 = vunpack.c.l.s4 1966171168
        %v755 = vunpack.c.0.s8 %v754
        %v756 = vlaneseq
        %v757 = vshrl.u32 %v756, 7
        %v758 = vsub.s32 %v755, %v757
        %v759 = vrot.slane %v743, %v758
        %v761 = vunpack.c.l.s4 1966171168
        %v762 = vunpack.c.0.s8 %v761
        %v763 = vlaneseq
        %v764 = vshrl.u32 %v763, 7
        %v765 = vsub.s32 %v762, %v764
        %v766 = vrot.slane %v744, %v765
        %v768 = vunpack.c.l.s4 1966171168
        %v769 = vunpack.c.0.s8 %v768
        %v770 = vlaneseq
        %v771 = vshrl.u32 %v770, 7
        %v772 = vsub.s32 %v769, %v771
        %v773 = vrot.slane %v745, %v772
        %v774 = vcombine.high %v752, %v752
        %v775 = vcombine.high %v759, %v759
        %v776 = vcombine.high %v766, %v766
        %v777 = vcombine.high %v773, %v773
        %v778 = vcombine.high %v424, %v424
        %v780 = vunpack.c.l.s4 1966171168
        %v781 = vunpack.c.0.s8 %v780
        %v782 = vlaneseq
        %v783 = vshrl.u32 %v782, 7
        %v784 = vsub.s32 %v781, %v783
        %v785 = vrot.slane %v424, %v784
        %v787 = vunpack.c.l.s4 1966171168
        %v788 = vunpack.c.0.s8 %v787
        %v789 = vlaneseq
        %v790 = vshrl.u32 %v789, 7
        %v791 = vsub.s32 %v788, %v790
        %v792 = vrot.slane %v778, %v791
        %v793 = vcombine.high %v785, %v785
        %v794 = vcombine.high %v792, %v792
        %v796 = vunpack.c.l.s4 1966171168
        %v797 = vunpack.c.0.s8 %v796
        %v798 = vlaneseq
        %v799 = vshrl.u32 %v798, 7
        %v800 = vsub.s32 %v797, %v799
        %v801 = vrot.slane %v785, %v800
        %v803 = vunpack.c.l.s4 1966171168
        %v804 = vunpack.c.0.s8 %v803
        %v805 = vlaneseq
        %v806 = vshrl.u32 %v805, 7
        %v807 = vsub.s32 %v804, %v806
        %v808 = vrot.slane %v792, %v807
        %v810 = vunpack.c.l.s4 1966171168
        %v811 = vunpack.c.0.s8 %v810
        %v812 = vlaneseq
        %v813 = vshrl.u32 %v812, 7
        %v814 = vsub.s32 %v811, %v813
        %v815 = vrot.slane %v793, %v814
        %v817 = vunpack.c.l.s4 1966171168
        %v818 = vunpack.c.0.s8 %v817
        %v819 = vlaneseq
        %v820 = vshrl.u32 %v819, 7
        %v821 = vsub.s32 %v818, %v820
        %v822 = vrot.slane %v794, %v821
        %v823 = vcombine.high %v801, %v801
        %v824 = vcombine.high %v808, %v808
        %v825 = vcombine.high %v815, %v815
        %v826 = vcombine.high %v822, %v822
        %v827 = vcombine.high %v429, %v429
        %v829 = vunpack.c.l.s4 1966171168
        %v830 = vunpack.c.0.s8 %v829
        %v831 = vlaneseq
        %v832 = vshrl.u32 %v831, 7
        %v833 = vsub.s32 %v830, %v832
        %v834 = vrot.slane %v429, %v833
        %v836 = vunpack.c.l.s4 1966171168
        %v837 = vunpack.c.0.s8 %v836
        %v838 = vlaneseq
        %v839 = vshrl.u32 %v838, 7
        %v840 = vsub.s32 %v837, %v839
        %v841 = vrot.slane %v827, %v840
        %v842 = vcombine.high %v834, %v834
        %v843 = vcombine.high %v841, %v841
        %v845 = vunpack.c.l.s4 1966171168
        %v846 = vunpack.c.0.s8 %v845
        %v847 = vlaneseq
        %v848 = vshrl.u32 %v847, 7
        %v849 = vsub.s32 %v846, %v848
        %v850 = vrot.slane %v834, %v849
        %v852 = vunpack.c.l.s4 1966171168
        %v853 = vunpack.c.0.s8 %v852
        %v854 = vlaneseq
        %v855 = vshrl.u32 %v854, 7
        %v856 = vsub.s32 %v853, %v855
        %v857 = vrot.slane %v841, %v856
        %v859 = vunpack.c.l.s4 1966171168
        %v860 = vunpack.c.0.s8 %v859
        %v861 = vlaneseq
        %v862 = vshrl.u32 %v861, 7
        %v863 = vsub.s32 %v860, %v862
        %v864 = vrot.slane %v842, %v863
        %v866 = vunpack.c.l.s4 1966171168
        %v867 = vunpack.c.0.s8 %v866
        %v868 = vlaneseq
        %v869 = vshrl.u32 %v868, 7
        %v870 = vsub.s32 %v867, %v869
        %v871 = vrot.slane %v843, %v870
        %v872 = vcombine.high %v850, %v850
        %v873 = vcombine.high %v857, %v857
        %v874 = vcombine.high %v864, %v864
        %v875 = vcombine.high %v871, %v871
        %v876 = vcombine.high %v434, %v434
        %v878 = vunpack.c.l.s4 1966171168
        %v879 = vunpack.c.0.s8 %v878
        %v880 = vlaneseq
        %v881 = vshrl.u32 %v880, 7
        %v882 = vsub.s32 %v879, %v881
        %v883 = vrot.slane %v434, %v882
        %v885 = vunpack.c.l.s4 1966171168
        %v886 = vunpack.c.0.s8 %v885
        %v887 = vlaneseq
        %v888 = vshrl.u32 %v887, 7
        %v889 = vsub.s32 %v886, %v888
        %v890 = vrot.slane %v876, %v889
        %v891 = vcombine.high %v883, %v883
        %v892 = vcombine.high %v890, %v890
        %v894 = vunpack.c.l.s4 1966171168
        %v895 = vunpack.c.0.s8 %v894
        %v896 = vlaneseq
        %v897 = vshrl.u32 %v896, 7
        %v898 = vsub.s32 %v895, %v897
        %v899 = vrot.slane %v883, %v898
        %v901 = vunpack.c.l.s4 1966171168
        %v902 = vunpack.c.0.s8 %v901
        %v903 = vlaneseq
        %v904 = vshrl.u32 %v903, 7
        %v905 = vsub.s32 %v902, %v904
        %v906 = vrot.slane %v890, %v905
        %v908 = vunpack.c.l.s4 1966171168
        %v909 = vunpack.c.0.s8 %v908
        %v910 = vlaneseq
        %v911 = vshrl.u32 %v910, 7
        %v912 = vsub.s32 %v909, %v911
        %v913 = vrot.slane %v891, %v912
        %v915 = vunpack.c.l.s4 1966171168
        %v916 = vunpack.c.0.s8 %v915
        %v917 = vlaneseq
        %v918 = vshrl.u32 %v917, 7
        %v919 = vsub.s32 %v916, %v918
        %v920 = vrot.slane %v892, %v919
        %v921 = vcombine.high %v899, %v899
        %v922 = vcombine.high %v906, %v906
        %v923 = vcombine.high %v913, %v913
        %v924 = vcombine.high %v920, %v920
        %v925 = vcombine.high %v439, %v439
        %v927 = vunpack.c.l.s4 1966171168
        %v928 = vunpack.c.0.s8 %v927
        %v929 = vlaneseq
        %v930 = vshrl.u32 %v929, 7
        %v931 = vsub.s32 %v928, %v930
        %v932 = vrot.slane %v439, %v931
        %v934 = vunpack.c.l.s4 1966171168
        %v935 = vunpack.c.0.s8 %v934
        %v936 = vlaneseq
        %v937 = vshrl.u32 %v936, 7
        %v938 = vsub.s32 %v935, %v937
        %v939 = vrot.slane %v925, %v938
        %v940 = vcombine.high %v932, %v932
        %v941 = vcombine.high %v939, %v939
        %v943 = vunpack.c.l.s4 1966171168
        %v944 = vunpack.c.0.s8 %v943
        %v945 = vlaneseq
        %v946 = vshrl.u32 %v945, 7
        %v947 = vsub.s32 %v944, %v946
        %v948 = vrot.slane %v932, %v947
        %v950 = vunpack.c.l.s4 1966171168
        %v951 = vunpack.c.0.s8 %v950
        %v952 = vlaneseq
        %v953 = vshrl.u32 %v952, 7
        %v954 = vsub.s32 %v951, %v953
        %v955 = vrot.slane %v939, %v954
        %v957 = vunpack.c.l.s4 1966171168
        %v958 = vunpack.c.0.s8 %v957
        %v959 = vlaneseq
        %v960 = vshrl.u32 %v959, 7
        %v961 = vsub.s32 %v958, %v960
        %v962 = vrot.slane %v940, %v961
        %v964 = vunpack.c.l.s4 1966171168
        %v965 = vunpack.c.0.s8 %v964
        %v966 = vlaneseq
        %v967 = vshrl.u32 %v966, 7
        %v968 = vsub.s32 %v965, %v967
        %v969 = vrot.slane %v941, %v968
        %v970 = vcombine.high %v948, %v948
        %v971 = vcombine.high %v955, %v955
        %v972 = vcombine.high %v962, %v962
        %v973 = vcombine.high %v969, %v969
        %v974 = vcombine.high %v444, %v444
        %v976 = vunpack.c.l.s4 1966171168
        %v977 = vunpack.c.0.s8 %v976
        %v978 = vlaneseq
        %v979 = vshrl.u32 %v978, 7
        %v980 = vsub.s32 %v977, %v979
        %v981 = vrot.slane %v444, %v980
        %v983 = vunpack.c.l.s4 1966171168
        %v984 = vunpack.c.0.s8 %v983
        %v985 = vlaneseq
        %v986 = vshrl.u32 %v985, 7
        %v987 = vsub.s32 %v984, %v986
        %v988 = vrot.slane %v974, %v987
        %v989 = vcombine.high %v981, %v981
        %v990 = vcombine.high %v988, %v988
        %v992 = vunpack.c.l.s4 1966171168
        %v993 = vunpack.c.0.s8 %v992
        %v994 = vlaneseq
        %v995 = vshrl.u32 %v994, 7
        %v996 = vsub.s32 %v993, %v995
        %v997 = vrot.slane %v981, %v996
        %v999 = vunpack.c.l.s4 1966171168
        %v1000 = vunpack.c.0.s8 %v999
        %v1001 = vlaneseq
        %v1002 = vshrl.u32 %v1001, 7
        %v1003 = vsub.s32 %v1000, %v1002
        %v1004 = vrot.slane %v988, %v1003
        %v1006 = vunpack.c.l.s4 1966171168
        %v1007 = vunpack.c.0.s8 %v1006
        %v1008 = vlaneseq
        %v1009 = vshrl.u32 %v1008, 7
        %v1010 = vsub.s32 %v1007, %v1009
        %v1011 = vrot.slane %v989, %v1010
        %v1013 = vunpack.c.l.s4 1966171168
        %v1014 = vunpack.c.0.s8 %v1013
        %v1015 = vlaneseq
        %v1016 = vshrl.u32 %v1015, 7
        %v1017 = vsub.s32 %v1014, %v1016
        %v1018 = vrot.slane %v990, %v1017
        %v1019 = vcombine.high %v997, %v997
        %v1020 = vcombine.high %v1004, %v1004
        %v1021 = vcombine.high %v1011, %v1011
        %v1022 = vcombine.high %v1018, %v1018
        %v1023 = vcombine.high %v449, %v449
        %v1025 = vunpack.c.l.s4 1966171168
        %v1026 = vunpack.c.0.s8 %v1025
        %v1027 = vlaneseq
        %v1028 = vshrl.u32 %v1027, 7
        %v1029 = vsub.s32 %v1026, %v1028
        %v1030 = vrot.slane %v449, %v1029
        %v1032 = vunpack.c.l.s4 1966171168
        %v1033 = vunpack.c.0.s8 %v1032
        %v1034 = vlaneseq
        %v1035 = vshrl.u32 %v1034, 7
        %v1036 = vsub.s32 %v1033, %v1035
        %v1037 = vrot.slane %v1023, %v1036
        %v1038 = vcombine.high %v1030, %v1030
        %v1039 = vcombine.high %v1037, %v1037
        %v1041 = vunpack.c.l.s4 1966171168
        %v1042 = vunpack.c.0.s8 %v1041
        %v1043 = vlaneseq
        %v1044 = vshrl.u32 %v1043, 7
        %v1045 = vsub.s32 %v1042, %v1044
        %v1046 = vrot.slane %v1030, %v1045
        %v1048 = vunpack.c.l.s4 1966171168
        %v1049 = vunpack.c.0.s8 %v1048
        %v1050 = vlaneseq
        %v1051 = vshrl.u32 %v1050, 7
        %v1052 = vsub.s32 %v1049, %v1051
        %v1053 = vrot.slane %v1037, %v1052
        %v1055 = vunpack.c.l.s4 1966171168
        %v1056 = vunpack.c.0.s8 %v1055
        %v1057 = vlaneseq
        %v1058 = vshrl.u32 %v1057, 7
        %v1059 = vsub.s32 %v1056, %v1058
        %v1060 = vrot.slane %v1038, %v1059
        %v1062 = vunpack.c.l.s4 1966171168
        %v1063 = vunpack.c.0.s8 %v1062
        %v1064 = vlaneseq
        %v1065 = vshrl.u32 %v1064, 7
        %v1066 = vsub.s32 %v1063, %v1065
        %v1067 = vrot.slane %v1039, %v1066
        %v1068 = vcombine.high %v1046, %v1046
        %v1069 = vcombine.high %v1053, %v1053
        %v1070 = vcombine.high %v1060, %v1060
        %v1071 = vcombine.high %v1067, %v1067
        %v1072 = vcombine.high %v454, %v454
        %v1074 = vunpack.c.l.s4 1966171168
        %v1075 = vunpack.c.0.s8 %v1074
        %v1076 = vlaneseq
        %v1077 = vshrl.u32 %v1076, 7
        %v1078 = vsub.s32 %v1075, %v1077
        %v1079 = vrot.slane %v454, %v1078
        %v1081 = vunpack.c.l.s4 1966171168
        %v1082 = vunpack.c.0.s8 %v1081
        %v1083 = vlaneseq
        %v1084 = vshrl.u32 %v1083, 7
        %v1085 = vsub.s32 %v1082, %v1084
        %v1086 = vrot.slane %v1072, %v1085
        %v1087 = vcombine.high %v1079, %v1079
        %v1088 = vcombine.high %v1086, %v1086
        %v1090 = vunpack.c.l.s4 1966171168
        %v1091 = vunpack.c.0.s8 %v1090
        %v1092 = vlaneseq
        %v1093 = vshrl.u32 %v1092, 7
        %v1094 = vsub.s32 %v1091, %v1093
        %v1095 = vrot.slane %v1079, %v1094
        %v1097 = vunpack.c.l.s4 1966171168
        %v1098 = vunpack.c.0.s8 %v1097
        %v1099 = vlaneseq
        %v1100 = vshrl.u32 %v1099, 7
        %v1101 = vsub.s32 %v1098, %v1100
        %v1102 = vrot.slane %v1086, %v1101
        %v1104 = vunpack.c.l.s4 1966171168
        %v1105 = vunpack.c.0.s8 %v1104
        %v1106 = vlaneseq
        %v1107 = vshrl.u32 %v1106, 7
        %v1108 = vsub.s32 %v1105, %v1107
        %v1109 = vrot.slane %v1087, %v1108
        %v1111 = vunpack.c.l.s4 1966171168
        %v1112 = vunpack.c.0.s8 %v1111
        %v1113 = vlaneseq
        %v1114 = vshrl.u32 %v1113, 7
        %v1115 = vsub.s32 %v1112, %v1114
        %v1116 = vrot.slane %v1088, %v1115
        %v1117 = vcombine.high %v1095, %v1095
        %v1118 = vcombine.high %v1102, %v1102
        %v1119 = vcombine.high %v1109, %v1109
        %v1120 = vcombine.high %v1116, %v1116
        %v1121 = vcombine.high %v459, %v459
        %v1123 = vunpack.c.l.s4 1966171168
        %v1124 = vunpack.c.0.s8 %v1123
        %v1125 = vlaneseq
        %v1126 = vshrl.u32 %v1125, 7
        %v1127 = vsub.s32 %v1124, %v1126
        %v1128 = vrot.slane %v459, %v1127
        %v1130 = vunpack.c.l.s4 1966171168
        %v1131 = vunpack.c.0.s8 %v1130
        %v1132 = vlaneseq
        %v1133 = vshrl.u32 %v1132, 7
        %v1134 = vsub.s32 %v1131, %v1133
        %v1135 = vrot.slane %v1121, %v1134
        %v1136 = vcombine.high %v1128, %v1128
        %v1137 = vcombine.high %v1135, %v1135
        %v1139 = vunpack.c.l.s4 1966171168
        %v1140 = vunpack.c.0.s8 %v1139
        %v1141 = vlaneseq
        %v1142 = vshrl.u32 %v1141, 7
        %v1143 = vsub.s32 %v1140, %v1142
        %v1144 = vrot.slane %v1128, %v1143
        %v1146 = vunpack.c.l.s4 1966171168
        %v1147 = vunpack.c.0.s8 %v1146
        %v1148 = vlaneseq
        %v1149 = vshrl.u32 %v1148, 7
        %v1150 = vsub.s32 %v1147, %v1149
        %v1151 = vrot.slane %v1135, %v1150
        %v1153 = vunpack.c.l.s4 1966171168
        %v1154 = vunpack.c.0.s8 %v1153
        %v1155 = vlaneseq
        %v1156 = vshrl.u32 %v1155, 7
        %v1157 = vsub.s32 %v1154, %v1156
        %v1158 = vrot.slane %v1136, %v1157
        %v1160 = vunpack.c.l.s4 1966171168
        %v1161 = vunpack.c.0.s8 %v1160
        %v1162 = vlaneseq
        %v1163 = vshrl.u32 %v1162, 7
        %v1164 = vsub.s32 %v1161, %v1163
        %v1165 = vrot.slane %v1137, %v1164
        %v1166 = vcombine.high %v1144, %v1144
        %v1167 = vcombine.high %v1151, %v1151
        %v1168 = vcombine.high %v1158, %v1158
        %v1169 = vcombine.high %v1165, %v1165
        %v1170 = vcombine.high %v464, %v464
        %v1172 = vunpack.c.l.s4 1966171168
        %v1173 = vunpack.c.0.s8 %v1172
        %v1174 = vlaneseq
        %v1175 = vshrl.u32 %v1174, 7
        %v1176 = vsub.s32 %v1173, %v1175
        %v1177 = vrot.slane %v464, %v1176
        %v1179 = vunpack.c.l.s4 1966171168
        %v1180 = vunpack.c.0.s8 %v1179
        %v1181 = vlaneseq
        %v1182 = vshrl.u32 %v1181, 7
        %v1183 = vsub.s32 %v1180, %v1182
        %v1184 = vrot.slane %v1170, %v1183
        %v1185 = vcombine.high %v1177, %v1177
        %v1186 = vcombine.high %v1184, %v1184
        %v1188 = vunpack.c.l.s4 1966171168
        %v1189 = vunpack.c.0.s8 %v1188
        %v1190 = vlaneseq
        %v1191 = vshrl.u32 %v1190, 7
        %v1192 = vsub.s32 %v1189, %v1191
        %v1193 = vrot.slane %v1177, %v1192
        %v1195 = vunpack.c.l.s4 1966171168
        %v1196 = vunpack.c.0.s8 %v1195
        %v1197 = vlaneseq
        %v1198 = vshrl.u32 %v1197, 7
        %v1199 = vsub.s32 %v1196, %v1198
        %v1200 = vrot.slane %v1184, %v1199
        %v1202 = vunpack.c.l.s4 1966171168
        %v1203 = vunpack.c.0.s8 %v1202
        %v1204 = vlaneseq
        %v1205 = vshrl.u32 %v1204, 7
        %v1206 = vsub.s32 %v1203, %v1205
        %v1207 = vrot.slane %v1185, %v1206
        %v1209 = vunpack.c.l.s4 1966171168
        %v1210 = vunpack.c.0.s8 %v1209
        %v1211 = vlaneseq
        %v1212 = vshrl.u32 %v1211, 7
        %v1213 = vsub.s32 %v1210, %v1212
        %v1214 = vrot.slane %v1186, %v1213
        %v1215 = vcombine.high %v1193, %v1193
        %v1216 = vcombine.high %v1200, %v1200
        %v1217 = vcombine.high %v1207, %v1207
        %v1218 = vcombine.high %v1214, %v1214
        %v1219 = vcombine.high %v469, %v469
        %v1221 = vunpack.c.l.s4 1966171168
        %v1222 = vunpack.c.0.s8 %v1221
        %v1223 = vlaneseq
        %v1224 = vshrl.u32 %v1223, 7
        %v1225 = vsub.s32 %v1222, %v1224
        %v1226 = vrot.slane %v469, %v1225
        %v1228 = vunpack.c.l.s4 1966171168
        %v1229 = vunpack.c.0.s8 %v1228
        %v1230 = vlaneseq
        %v1231 = vshrl.u32 %v1230, 7
        %v1232 = vsub.s32 %v1229, %v1231
        %v1233 = vrot.slane %v1219, %v1232
        %v1234 = vcombine.high %v1226, %v1226
        %v1235 = vcombine.high %v1233, %v1233
        %v1237 = vunpack.c.l.s4 1966171168
        %v1238 = vunpack.c.0.s8 %v1237
        %v1239 = vlaneseq
        %v1240 = vshrl.u32 %v1239, 7
        %v1241 = vsub.s32 %v1238, %v1240
        %v1242 = vrot.slane %v1226, %v1241
        %v1244 = vunpack.c.l.s4 1966171168
        %v1245 = vunpack.c.0.s8 %v1244
        %v1246 = vlaneseq
        %v1247 = vshrl.u32 %v1246, 7
        %v1248 = vsub.s32 %v1245, %v1247
        %v1249 = vrot.slane %v1233, %v1248
        %v1251 = vunpack.c.l.s4 1966171168
        %v1252 = vunpack.c.0.s8 %v1251
        %v1253 = vlaneseq
        %v1254 = vshrl.u32 %v1253, 7
        %v1255 = vsub.s32 %v1252, %v1254
        %v1256 = vrot.slane %v1234, %v1255
        %v1258 = vunpack.c.l.s4 1966171168
        %v1259 = vunpack.c.0.s8 %v1258
        %v1260 = vlaneseq
        %v1261 = vshrl.u32 %v1260, 7
        %v1262 = vsub.s32 %v1259, %v1261
        %v1263 = vrot.slane %v1235, %v1262
        %v1264 = vcombine.high %v1242, %v1242
        %v1265 = vcombine.high %v1249, %v1249
        %v1266 = vcombine.high %v1256, %v1256
        %v1267 = vcombine.high %v1263, %v1263
        %v1268 = vcombine.high %v474, %v474
        %v1270 = vunpack.c.l.s4 1966171168
        %v1271 = vunpack.c.0.s8 %v1270
        %v1272 = vlaneseq
        %v1273 = vshrl.u32 %v1272, 7
        %v1274 = vsub.s32 %v1271, %v1273
        %v1275 = vrot.slane %v474, %v1274
        %v1277 = vunpack.c.l.s4 1966171168
        %v1278 = vunpack.c.0.s8 %v1277
        %v1279 = vlaneseq
        %v1280 = vshrl.u32 %v1279, 7
        %v1281 = vsub.s32 %v1278, %v1280
        %v1282 = vrot.slane %v1268, %v1281
        %v1283 = vcombine.high %v1275, %v1275
        %v1284 = vcombine.high %v1282, %v1282
        %v1286 = vunpack.c.l.s4 1966171168
        %v1287 = vunpack.c.0.s8 %v1286
        %v1288 = vlaneseq
        %v1289 = vshrl.u32 %v1288, 7
        %v1290 = vsub.s32 %v1287, %v1289
        %v1291 = vrot.slane %v1275, %v1290
        %v1293 = vunpack.c.l.s4 1966171168
        %v1294 = vunpack.c.0.s8 %v1293
        %v1295 = vlaneseq
        %v1296 = vshrl.u32 %v1295, 7
        %v1297 = vsub.s32 %v1294, %v1296
        %v1298 = vrot.slane %v1282, %v1297
        %v1300 = vunpack.c.l.s4 1966171168
        %v1301 = vunpack.c.0.s8 %v1300
        %v1302 = vlaneseq
        %v1303 = vshrl.u32 %v1302, 7
        %v1304 = vsub.s32 %v1301, %v1303
        %v1305 = vrot.slane %v1283, %v1304
        %v1307 = vunpack.c.l.s4 1966171168
        %v1308 = vunpack.c.0.s8 %v1307
        %v1309 = vlaneseq
        %v1310 = vshrl.u32 %v1309, 7
        %v1311 = vsub.s32 %v1308, %v1310
        %v1312 = vrot.slane %v1284, %v1311
        %v1313 = vcombine.high %v1291, %v1291
        %v1314 = vcombine.high %v1298, %v1298
        %v1315 = vcombine.high %v1305, %v1305
        %v1316 = vcombine.high %v1312, %v1312
        %v1317 = vcombine.high %v479, %v479
        %v1319 = vunpack.c.l.s4 1966171168
        %v1320 = vunpack.c.0.s8 %v1319
        %v1321 = vlaneseq
        %v1322 = vshrl.u32 %v1321, 7
        %v1323 = vsub.s32 %v1320, %v1322
        %v1324 = vrot.slane %v479, %v1323
        %v1326 = vunpack.c.l.s4 1966171168
        %v1327 = vunpack.c.0.s8 %v1326
        %v1328 = vlaneseq
        %v1329 = vshrl.u32 %v1328, 7
        %v1330 = vsub.s32 %v1327, %v1329
        %v1331 = vrot.slane %v1317, %v1330
        %v1332 = vcombine.high %v1324, %v1324
        %v1333 = vcombine.high %v1331, %v1331
        %v1335 = vunpack.c.l.s4 1966171168
        %v1336 = vunpack.c.0.s8 %v1335
        %v1337 = vlaneseq
        %v1338 = vshrl.u32 %v1337, 7
        %v1339 = vsub.s32 %v1336, %v1338
        %v1340 = vrot.slane %v1324, %v1339
        %v1342 = vunpack.c.l.s4 1966171168
        %v1343 = vunpack.c.0.s8 %v1342
        %v1344 = vlaneseq
        %v1345 = vshrl.u32 %v1344, 7
        %v1346 = vsub.s32 %v1343, %v1345
        %v1347 = vrot.slane %v1331, %v1346
        %v1349 = vunpack.c.l.s4 1966171168
        %v1350 = vunpack.c.0.s8 %v1349
        %v1351 = vlaneseq
        %v1352 = vshrl.u32 %v1351, 7
        %v1353 = vsub.s32 %v1350, %v1352
        %v1354 = vrot.slane %v1332, %v1353
        %v1356 = vunpack.c.l.s4 1966171168
        %v1357 = vunpack.c.0.s8 %v1356
        %v1358 = vlaneseq
        %v1359 = vshrl.u32 %v1358, 7
        %v1360 = vsub.s32 %v1357, %v1359
        %v1361 = vrot.slane %v1333, %v1360
        %v1362 = vcombine.high %v1340, %v1340
        %v1363 = vcombine.high %v1347, %v1347
        %v1364 = vcombine.high %v1354, %v1354
        %v1365 = vcombine.high %v1361, %v1361
        %v1366 = vcombine.high %v484, %v484
        %v1368 = vunpack.c.l.s4 1966171168
        %v1369 = vunpack.c.0.s8 %v1368
        %v1370 = vlaneseq
        %v1371 = vshrl.u32 %v1370, 7
        %v1372 = vsub.s32 %v1369, %v1371
        %v1373 = vrot.slane %v484, %v1372
        %v1375 = vunpack.c.l.s4 1966171168
        %v1376 = vunpack.c.0.s8 %v1375
        %v1377 = vlaneseq
        %v1378 = vshrl.u32 %v1377, 7
        %v1379 = vsub.s32 %v1376, %v1378
        %v1380 = vrot.slane %v1366, %v1379
        %v1381 = vcombine.high %v1373, %v1373
        %v1382 = vcombine.high %v1380, %v1380
        %v1384 = vunpack.c.l.s4 1966171168
        %v1385 = vunpack.c.0.s8 %v1384
        %v1386 = vlaneseq
        %v1387 = vshrl.u32 %v1386, 7
        %v1388 = vsub.s32 %v1385, %v1387
        %v1389 = vrot.slane %v1373, %v1388
        %v1391 = vunpack.c.l.s4 1966171168
        %v1392 = vunpack.c.0.s8 %v1391
        %v1393 = vlaneseq
        %v1394 = vshrl.u32 %v1393, 7
        %v1395 = vsub.s32 %v1392, %v1394
        %v1396 = vrot.slane %v1380, %v1395
        %v1398 = vunpack.c.l.s4 1966171168
        %v1399 = vunpack.c.0.s8 %v1398
        %v1400 = vlaneseq
        %v1401 = vshrl.u32 %v1400, 7
        %v1402 = vsub.s32 %v1399, %v1401
        %v1403 = vrot.slane %v1381, %v1402
        %v1405 = vunpack.c.l.s4 1966171168
        %v1406 = vunpack.c.0.s8 %v1405
        %v1407 = vlaneseq
        %v1408 = vshrl.u32 %v1407, 7
        %v1409 = vsub.s32 %v1406, %v1408
        %v1410 = vrot.slane %v1382, %v1409
        %v1411 = vcombine.high %v1389, %v1389
        %v1412 = vcombine.high %v1396, %v1396
        %v1413 = vcombine.high %v1403, %v1403
        %v1414 = vcombine.high %v1410, %v1410
        %v1415 = vlaneseq
        %v1416 = vshrl.u32 %v1415, 7
        %v1417 = vsub.s32 0, %v1416
        %v1418 = vrot.slane %v654, %v1417
        %v1419 = vlaneseq
        %v1420 = vshrl.u32 %v1419, 7
        %v1421 = vsub.s32 0, %v1420
        %v1422 = vrot.slane %v668, %v1421
        %v1423 = vlaneseq
        %v1424 = vshrl.u32 %v1423, 7
        %v1425 = vsub.s32 0, %v1424
        %v1426 = vrot.slane %v676, %v1425
        %v1427 = vlaneseq
        %v1428 = vshrl.u32 %v1427, 7
        %v1429 = vsub.s32 0, %v1428
        %v1430 = vrot.slane %v678, %v1429
        %v1431 = vlaneseq
        %v1432 = vshrl.u32 %v1431, 7
        %v1433 = vsub.s32 0, %v1432
        %v1434 = vrot.slane %v661, %v1433
        %v1435 = vlaneseq
        %v1436 = vshrl.u32 %v1435, 7
        %v1437 = vsub.s32 0, %v1436
        %v1438 = vrot.slane %v675, %v1437
        %v1439 = vlaneseq
        %v1440 = vshrl.u32 %v1439, 7
        %v1441 = vsub.s32 0, %v1440
        %v1442 = vrot.slane %v677, %v1441
        %v1443 = vlaneseq
        %v1444 = vshrl.u32 %v1443, 7
        %v1445 = vsub.s32 0, %v1444
        %v1446 = vrot.slane %v679, %v1445
        %v1447 = vlaneseq
        %v1448 = vshrl.u32 %v1447, 7
        %v1449 = vsub.s32 0, %v1448
        %v1450 = vrot.slane %v703, %v1449
        %v1451 = vlaneseq
        %v1452 = vshrl.u32 %v1451, 7
        %v1453 = vsub.s32 0, %v1452
        %v1454 = vrot.slane %v717, %v1453
        %v1455 = vlaneseq
        %v1456 = vshrl.u32 %v1455, 7
        %v1457 = vsub.s32 0, %v1456
        %v1458 = vrot.slane %v725, %v1457
        %v1459 = vlaneseq
        %v1460 = vshrl.u32 %v1459, 7
        %v1461 = vsub.s32 0, %v1460
        %v1462 = vrot.slane %v727, %v1461
        %v1463 = vlaneseq
        %v1464 = vshrl.u32 %v1463, 7
        %v1465 = vsub.s32 0, %v1464
        %v1466 = vrot.slane %v710, %v1465
        %v1467 = vlaneseq
        %v1468 = vshrl.u32 %v1467, 7
        %v1469 = vsub.s32 0, %v1468
        %v1470 = vrot.slane %v724, %v1469
        %v1471 = vlaneseq
        %v1472 = vshrl.u32 %v1471, 7
        %v1473 = vsub.s32 0, %v1472
        %v1474 = vrot.slane %v726, %v1473
        %v1475 = vlaneseq
        %v1476 = vshrl.u32 %v1475, 7
        %v1477 = vsub.s32 0, %v1476
        %v1478 = vrot.slane %v728, %v1477
        %v1479 = vlaneseq
        %v1480 = vshrl.u32 %v1479, 7
        %v1481 = vsub.s32 0, %v1480
        %v1482 = vrot.slane %v752, %v1481
        %v1483 = vlaneseq
        %v1484 = vshrl.u32 %v1483, 7
        %v1485 = vsub.s32 0, %v1484
        %v1486 = vrot.slane %v766, %v1485
        %v1487 = vlaneseq
        %v1488 = vshrl.u32 %v1487, 7
        %v1489 = vsub.s32 0, %v1488
        %v1490 = vrot.slane %v774, %v1489
        %v1491 = vlaneseq
        %v1492 = vshrl.u32 %v1491, 7
        %v1493 = vsub.s32 0, %v1492
        %v1494 = vrot.slane %v776, %v1493
        %v1495 = vlaneseq
        %v1496 = vshrl.u32 %v1495, 7
        %v1497 = vsub.s32 0, %v1496
        %v1498 = vrot.slane %v759, %v1497
        %v1499 = vlaneseq
        %v1500 = vshrl.u32 %v1499, 7
        %v1501 = vsub.s32 0, %v1500
        %v1502 = vrot.slane %v773, %v1501
        %v1503 = vlaneseq
        %v1504 = vshrl.u32 %v1503, 7
        %v1505 = vsub.s32 0, %v1504
        %v1506 = vrot.slane %v775, %v1505
        %v1507 = vlaneseq
        %v1508 = vshrl.u32 %v1507, 7
        %v1509 = vsub.s32 0, %v1508
        %v1510 = vrot.slane %v777, %v1509
        %v1511 = vlaneseq
        %v1512 = vshrl.u32 %v1511, 7
        %v1513 = vsub.s32 0, %v1512
        %v1514 = vrot.slane %v801, %v1513
        %v1515 = vlaneseq
        %v1516 = vshrl.u32 %v1515, 7
        %v1517 = vsub.s32 0, %v1516
        %v1518 = vrot.slane %v815, %v1517
        %v1519 = vlaneseq
        %v1520 = vshrl.u32 %v1519, 7
        %v1521 = vsub.s32 0, %v1520
        %v1522 = vrot.slane %v823, %v1521
        %v1523 = vlaneseq
        %v1524 = vshrl.u32 %v1523, 7
        %v1525 = vsub.s32 0, %v1524
        %v1526 = vrot.slane %v825, %v1525
        %v1527 = vlaneseq
        %v1528 = vshrl.u32 %v1527, 7
        %v1529 = vsub.s32 0, %v1528
        %v1530 = vrot.slane %v808, %v1529
        %v1531 = vlaneseq
        %v1532 = vshrl.u32 %v1531, 7
        %v1533 = vsub.s32 0, %v1532
        %v1534 = vrot.slane %v822, %v1533
        %v1535 = vlaneseq
        %v1536 = vshrl.u32 %v1535, 7
        %v1537 = vsub.s32 0, %v1536
        %v1538 = vrot.slane %v824, %v1537
        %v1539 = vlaneseq
        %v1540 = vshrl.u32 %v1539, 7
        %v1541 = vsub.s32 0, %v1540
        %v1542 = vrot.slane %v826, %v1541
        %v1543 = vlaneseq
        %v1544 = vshrl.u32 %v1543, 7
        %v1545 = vsub.s32 0, %v1544
        %v1546 = vrot.slane %v850, %v1545
        %v1547 = vlaneseq
        %v1548 = vshrl.u32 %v1547, 7
        %v1549 = vsub.s32 0, %v1548
        %v1550 = vrot.slane %v864, %v1549
        %v1551 = vlaneseq
        %v1552 = vshrl.u32 %v1551, 7
        %v1553 = vsub.s32 0, %v1552
        %v1554 = vrot.slane %v872, %v1553
        %v1555 = vlaneseq
        %v1556 = vshrl.u32 %v1555, 7
        %v1557 = vsub.s32 0, %v1556
        %v1558 = vrot.slane %v874, %v1557
        %v1559 = vlaneseq
        %v1560 = vshrl.u32 %v1559, 7
        %v1561 = vsub.s32 0, %v1560
        %v1562 = vrot.slane %v857, %v1561
        %v1563 = vlaneseq
        %v1564 = vshrl.u32 %v1563, 7
        %v1565 = vsub.s32 0, %v1564
        %v1566 = vrot.slane %v871, %v1565
        %v1567 = vlaneseq
        %v1568 = vshrl.u32 %v1567, 7
        %v1569 = vsub.s32 0, %v1568
        %v1570 = vrot.slane %v873, %v1569
        %v1571 = vlaneseq
        %v1572 = vshrl.u32 %v1571, 7
        %v1573 = vsub.s32 0, %v1572
        %v1574 = vrot.slane %v875, %v1573
        %v1575 = vlaneseq
        %v1576 = vshrl.u32 %v1575, 7
        %v1577 = vsub.s32 0, %v1576
        %v1578 = vrot.slane %v899, %v1577
        %v1579 = vlaneseq
        %v1580 = vshrl.u32 %v1579, 7
        %v1581 = vsub.s32 0, %v1580
        %v1582 = vrot.slane %v913, %v1581
        %v1583 = vlaneseq
        %v1584 = vshrl.u32 %v1583, 7
        %v1585 = vsub.s32 0, %v1584
        %v1586 = vrot.slane %v921, %v1585
        %v1587 = vlaneseq
        %v1588 = vshrl.u32 %v1587, 7
        %v1589 = vsub.s32 0, %v1588
        %v1590 = vrot.slane %v923, %v1589
        %v1591 = vlaneseq
        %v1592 = vshrl.u32 %v1591, 7
        %v1593 = vsub.s32 0, %v1592
        %v1594 = vrot.slane %v906, %v1593
        %v1595 = vlaneseq
        %v1596 = vshrl.u32 %v1595, 7
        %v1597 = vsub.s32 0, %v1596
        %v1598 = vrot.slane %v920, %v1597
        %v1599 = vlaneseq
        %v1600 = vshrl.u32 %v1599, 7
        %v1601 = vsub.s32 0, %v1600
        %v1602 = vrot.slane %v922, %v1601
        %v1603 = vlaneseq
        %v1604 = vshrl.u32 %v1603, 7
        %v1605 = vsub.s32 0, %v1604
        %v1606 = vrot.slane %v924, %v1605
        %v1607 = vlaneseq
        %v1608 = vshrl.u32 %v1607, 7
        %v1609 = vsub.s32 0, %v1608
        %v1610 = vrot.slane %v948, %v1609
        %v1611 = vlaneseq
        %v1612 = vshrl.u32 %v1611, 7
        %v1613 = vsub.s32 0, %v1612
        %v1614 = vrot.slane %v962, %v1613
        %v1615 = vlaneseq
        %v1616 = vshrl.u32 %v1615, 7
        %v1617 = vsub.s32 0, %v1616
        %v1618 = vrot.slane %v970, %v1617
        %v1619 = vlaneseq
        %v1620 = vshrl.u32 %v1619, 7
        %v1621 = vsub.s32 0, %v1620
        %v1622 = vrot.slane %v972, %v1621
        %v1623 = vlaneseq
        %v1624 = vshrl.u32 %v1623, 7
        %v1625 = vsub.s32 0, %v1624
        %v1626 = vrot.slane %v955, %v1625
        %v1627 = vlaneseq
        %v1628 = vshrl.u32 %v1627, 7
        %v1629 = vsub.s32 0, %v1628
        %v1630 = vrot.slane %v969, %v1629
        %v1631 = vlaneseq
        %v1632 = vshrl.u32 %v1631, 7
        %v1633 = vsub.s32 0, %v1632
        %v1634 = vrot.slane %v971, %v1633
        %v1635 = vlaneseq
        %v1636 = vshrl.u32 %v1635, 7
        %v1637 = vsub.s32 0, %v1636
        %v1638 = vrot.slane %v973, %v1637
        %v1639 = vlaneseq
        %v1640 = vshrl.u32 %v1639, 7
        %v1641 = vsub.s32 0, %v1640
        %v1642 = vrot.slane %v997, %v1641
        %v1643 = vlaneseq
        %v1644 = vshrl.u32 %v1643, 7
        %v1645 = vsub.s32 0, %v1644
        %v1646 = vrot.slane %v1011, %v1645
        %v1647 = vlaneseq
        %v1648 = vshrl.u32 %v1647, 7
        %v1649 = vsub.s32 0, %v1648
        %v1650 = vrot.slane %v1019, %v1649
        %v1651 = vlaneseq
        %v1652 = vshrl.u32 %v1651, 7
        %v1653 = vsub.s32 0, %v1652
        %v1654 = vrot.slane %v1021, %v1653
        %v1655 = vlaneseq
        %v1656 = vshrl.u32 %v1655, 7
        %v1657 = vsub.s32 0, %v1656
        %v1658 = vrot.slane %v1004, %v1657
        %v1659 = vlaneseq
        %v1660 = vshrl.u32 %v1659, 7
        %v1661 = vsub.s32 0, %v1660
        %v1662 = vrot.slane %v1018, %v1661
        %v1663 = vlaneseq
        %v1664 = vshrl.u32 %v1663, 7
        %v1665 = vsub.s32 0, %v1664
        %v1666 = vrot.slane %v1020, %v1665
        %v1667 = vlaneseq
        %v1668 = vshrl.u32 %v1667, 7
        %v1669 = vsub.s32 0, %v1668
        %v1670 = vrot.slane %v1022, %v1669
        %v1671 = vlaneseq
        %v1672 = vshrl.u32 %v1671, 7
        %v1673 = vsub.s32 0, %v1672
        %v1674 = vrot.slane %v1046, %v1673
        %v1675 = vlaneseq
        %v1676 = vshrl.u32 %v1675, 7
        %v1677 = vsub.s32 0, %v1676
        %v1678 = vrot.slane %v1060, %v1677
        %v1679 = vlaneseq
        %v1680 = vshrl.u32 %v1679, 7
        %v1681 = vsub.s32 0, %v1680
        %v1682 = vrot.slane %v1068, %v1681
        %v1683 = vlaneseq
        %v1684 = vshrl.u32 %v1683, 7
        %v1685 = vsub.s32 0, %v1684
        %v1686 = vrot.slane %v1070, %v1685
        %v1687 = vlaneseq
        %v1688 = vshrl.u32 %v1687, 7
        %v1689 = vsub.s32 0, %v1688
        %v1690 = vrot.slane %v1053, %v1689
        %v1691 = vlaneseq
        %v1692 = vshrl.u32 %v1691, 7
        %v1693 = vsub.s32 0, %v1692
        %v1694 = vrot.slane %v1067, %v1693
        %v1695 = vlaneseq
        %v1696 = vshrl.u32 %v1695, 7
        %v1697 = vsub.s32 0, %v1696
        %v1698 = vrot.slane %v1069, %v1697
        %v1699 = vlaneseq
        %v1700 = vshrl.u32 %v1699, 7
        %v1701 = vsub.s32 0, %v1700
        %v1702 = vrot.slane %v1071, %v1701
        %v1703 = vlaneseq
        %v1704 = vshrl.u32 %v1703, 7
        %v1705 = vsub.s32 0, %v1704
        %v1706 = vrot.slane %v1095, %v1705
        %v1707 = vlaneseq
        %v1708 = vshrl.u32 %v1707, 7
        %v1709 = vsub.s32 0, %v1708
        %v1710 = vrot.slane %v1109, %v1709
        %v1711 = vlaneseq
        %v1712 = vshrl.u32 %v1711, 7
        %v1713 = vsub.s32 0, %v1712
        %v1714 = vrot.slane %v1117, %v1713
        %v1715 = vlaneseq
        %v1716 = vshrl.u32 %v1715, 7
        %v1717 = vsub.s32 0, %v1716
        %v1718 = vrot.slane %v1119, %v1717
        %v1719 = vlaneseq
        %v1720 = vshrl.u32 %v1719, 7
        %v1721 = vsub.s32 0, %v1720
        %v1722 = vrot.slane %v1102, %v1721
        %v1723 = vlaneseq
        %v1724 = vshrl.u32 %v1723, 7
        %v1725 = vsub.s32 0, %v1724
        %v1726 = vrot.slane %v1116, %v1725
        %v1727 = vlaneseq
        %v1728 = vshrl.u32 %v1727, 7
        %v1729 = vsub.s32 0, %v1728
        %v1730 = vrot.slane %v1118, %v1729
        %v1731 = vlaneseq
        %v1732 = vshrl.u32 %v1731, 7
        %v1733 = vsub.s32 0, %v1732
        %v1734 = vrot.slane %v1120, %v1733
        %v1735 = vlaneseq
        %v1736 = vshrl.u32 %v1735, 7
        %v1737 = vsub.s32 0, %v1736
        %v1738 = vrot.slane %v1144, %v1737
        %v1739 = vlaneseq
        %v1740 = vshrl.u32 %v1739, 7
        %v1741 = vsub.s32 0, %v1740
        %v1742 = vrot.slane %v1158, %v1741
        %v1743 = vlaneseq
        %v1744 = vshrl.u32 %v1743, 7
        %v1745 = vsub.s32 0, %v1744
        %v1746 = vrot.slane %v1166, %v1745
        %v1747 = vlaneseq
        %v1748 = vshrl.u32 %v1747, 7
        %v1749 = vsub.s32 0, %v1748
        %v1750 = vrot.slane %v1168, %v1749
        %v1751 = vlaneseq
        %v1752 = vshrl.u32 %v1751, 7
        %v1753 = vsub.s32 0, %v1752
        %v1754 = vrot.slane %v1151, %v1753
        %v1755 = vlaneseq
        %v1756 = vshrl.u32 %v1755, 7
        %v1757 = vsub.s32 0, %v1756
        %v1758 = vrot.slane %v1165, %v1757
        %v1759 = vlaneseq
        %v1760 = vshrl.u32 %v1759, 7
        %v1761 = vsub.s32 0, %v1760
        %v1762 = vrot.slane %v1167, %v1761
        %v1763 = vlaneseq
        %v1764 = vshrl.u32 %v1763, 7
        %v1765 = vsub.s32 0, %v1764
        %v1766 = vrot.slane %v1169, %v1765
        %v1767 = vlaneseq
        %v1768 = vshrl.u32 %v1767, 7
        %v1769 = vsub.s32 0, %v1768
        %v1770 = vrot.slane %v1193, %v1769
        %v1771 = vlaneseq
        %v1772 = vshrl.u32 %v1771, 7
        %v1773 = vsub.s32 0, %v1772
        %v1774 = vrot.slane %v1207, %v1773
        %v1775 = vlaneseq
        %v1776 = vshrl.u32 %v1775, 7
        %v1777 = vsub.s32 0, %v1776
        %v1778 = vrot.slane %v1215, %v1777
        %v1779 = vlaneseq
        %v1780 = vshrl.u32 %v1779, 7
        %v1781 = vsub.s32 0, %v1780
        %v1782 = vrot.slane %v1217, %v1781
        %v1783 = vlaneseq
        %v1784 = vshrl.u32 %v1783, 7
        %v1785 = vsub.s32 0, %v1784
        %v1786 = vrot.slane %v1200, %v1785
        %v1787 = vlaneseq
        %v1788 = vshrl.u32 %v1787, 7
        %v1789 = vsub.s32 0, %v1788
        %v1790 = vrot.slane %v1214, %v1789
        %v1791 = vlaneseq
        %v1792 = vshrl.u32 %v1791, 7
        %v1793 = vsub.s32 0, %v1792
        %v1794 = vrot.slane %v1216, %v1793
        %v1795 = vlaneseq
        %v1796 = vshrl.u32 %v1795, 7
        %v1797 = vsub.s32 0, %v1796
        %v1798 = vrot.slane %v1218, %v1797
        %v1799 = vlaneseq
        %v1800 = vshrl.u32 %v1799, 7
        %v1801 = vsub.s32 0, %v1800
        %v1802 = vrot.slane %v1242, %v1801
        %v1803 = vlaneseq
        %v1804 = vshrl.u32 %v1803, 7
        %v1805 = vsub.s32 0, %v1804
        %v1806 = vrot.slane %v1256, %v1805
        %v1807 = vlaneseq
        %v1808 = vshrl.u32 %v1807, 7
        %v1809 = vsub.s32 0, %v1808
        %v1810 = vrot.slane %v1264, %v1809
        %v1811 = vlaneseq
        %v1812 = vshrl.u32 %v1811, 7
        %v1813 = vsub.s32 0, %v1812
        %v1814 = vrot.slane %v1266, %v1813
        %v1815 = vlaneseq
        %v1816 = vshrl.u32 %v1815, 7
        %v1817 = vsub.s32 0, %v1816
        %v1818 = vrot.slane %v1249, %v1817
        %v1819 = vlaneseq
        %v1820 = vshrl.u32 %v1819, 7
        %v1821 = vsub.s32 0, %v1820
        %v1822 = vrot.slane %v1263, %v1821
        %v1823 = vlaneseq
        %v1824 = vshrl.u32 %v1823, 7
        %v1825 = vsub.s32 0, %v1824
        %v1826 = vrot.slane %v1265, %v1825
        %v1827 = vlaneseq
        %v1828 = vshrl.u32 %v1827, 7
        %v1829 = vsub.s32 0, %v1828
        %v1830 = vrot.slane %v1267, %v1829
        %v1831 = vlaneseq
        %v1832 = vshrl.u32 %v1831, 7
        %v1833 = vsub.s32 0, %v1832
        %v1834 = vrot.slane %v1291, %v1833
        %v1835 = vlaneseq
        %v1836 = vshrl.u32 %v1835, 7
        %v1837 = vsub.s32 0, %v1836
        %v1838 = vrot.slane %v1305, %v1837
        %v1839 = vlaneseq
        %v1840 = vshrl.u32 %v1839, 7
        %v1841 = vsub.s32 0, %v1840
        %v1842 = vrot.slane %v1313, %v1841
        %v1843 = vlaneseq
        %v1844 = vshrl.u32 %v1843, 7
        %v1845 = vsub.s32 0, %v1844
        %v1846 = vrot.slane %v1315, %v1845
        %v1847 = vlaneseq
        %v1848 = vshrl.u32 %v1847, 7
        %v1849 = vsub.s32 0, %v1848
        %v1850 = vrot.slane %v1298, %v1849
        %v1851 = vlaneseq
        %v1852 = vshrl.u32 %v1851, 7
        %v1853 = vsub.s32 0, %v1852
        %v1854 = vrot.slane %v1312, %v1853
        %v1855 = vlaneseq
        %v1856 = vshrl.u32 %v1855, 7
        %v1857 = vsub.s32 0, %v1856
        %v1858 = vrot.slane %v1314, %v1857
        %v1859 = vlaneseq
        %v1860 = vshrl.u32 %v1859, 7
        %v1861 = vsub.s32 0, %v1860
        %v1862 = vrot.slane %v1316, %v1861
        %v1863 = vlaneseq
        %v1864 = vshrl.u32 %v1863, 7
        %v1865 = vsub.s32 0, %v1864
        %v1866 = vrot.slane %v1340, %v1865
        %v1867 = vlaneseq
        %v1868 = vshrl.u32 %v1867, 7
        %v1869 = vsub.s32 0, %v1868
        %v1870 = vrot.slane %v1354, %v1869
        %v1871 = vlaneseq
        %v1872 = vshrl.u32 %v1871, 7
        %v1873 = vsub.s32 0, %v1872
        %v1874 = vrot.slane %v1362, %v1873
        %v1875 = vlaneseq
        %v1876 = vshrl.u32 %v1875, 7
        %v1877 = vsub.s32 0, %v1876
        %v1878 = vrot.slane %v1364, %v1877
        %v1879 = vlaneseq
        %v1880 = vshrl.u32 %v1879, 7
        %v1881 = vsub.s32 0, %v1880
        %v1882 = vrot.slane %v1347, %v1881
        %v1883 = vlaneseq
        %v1884 = vshrl.u32 %v1883, 7
        %v1885 = vsub.s32 0, %v1884
        %v1886 = vrot.slane %v1361, %v1885
        %v1887 = vlaneseq
        %v1888 = vshrl.u32 %v1887, 7
        %v1889 = vsub.s32 0, %v1888
        %v1890 = vrot.slane %v1363, %v1889
        %v1891 = vlaneseq
        %v1892 = vshrl.u32 %v1891, 7
        %v1893 = vsub.s32 0, %v1892
        %v1894 = vrot.slane %v1365, %v1893
        %v1895 = vlaneseq
        %v1896 = vshrl.u32 %v1895, 7
        %v1897 = vsub.s32 0, %v1896
        %v1898 = vrot.slane %v1389, %v1897
        %v1899 = vlaneseq
        %v1900 = vshrl.u32 %v1899, 7
        %v1901 = vsub.s32 0, %v1900
        %v1902 = vrot.slane %v1403, %v1901
        %v1903 = vlaneseq
        %v1904 = vshrl.u32 %v1903, 7
        %v1905 = vsub.s32 0, %v1904
        %v1906 = vrot.slane %v1411, %v1905
        %v1907 = vlaneseq
        %v1908 = vshrl.u32 %v1907, 7
        %v1909 = vsub.s32 0, %v1908
        %v1910 = vrot.slane %v1413, %v1909
        %v1911 = vlaneseq
        %v1912 = vshrl.u32 %v1911, 7
        %v1913 = vsub.s32 0, %v1912
        %v1914 = vrot.slane %v1396, %v1913
        %v1915 = vlaneseq
        %v1916 = vshrl.u32 %v1915, 7
        %v1917 = vsub.s32 0, %v1916
        %v1918 = vrot.slane %v1410, %v1917
        %v1919 = vlaneseq
        %v1920 = vshrl.u32 %v1919, 7
        %v1921 = vsub.s32 0, %v1920
        %v1922 = vrot.slane %v1412, %v1921
        %v1923 = vlaneseq
        %v1924 = vshrl.u32 %v1923, 7
        %v1925 = vsub.s32 0, %v1924
        %v1926 = vrot.slane %v1414, %v1925
        %v2055 = vmul.f32 %v487, %v1418
        %v2056 = vmul.f32 %v488, %v1422
        %v2057 = vmul.f32 %v489, %v1426
        %v2058 = vmul.f32 %v490, %v1430
        %v2059 = vmul.f32 %v491, %v1434
        %v2060 = vmul.f32 %v492, %v1438
        %v2061 = vmul.f32 %v493, %v1442
        %v2062 = vmul.f32 %v494, %v1446
        %v2063 = vmul.f32 %v495, %v1450
        %v2064 = vmul.f32 %v496, %v1454
        %v2065 = vmul.f32 %v497, %v1458
        %v2066 = vmul.f32 %v498, %v1462
        %v2067 = vmul.f32 %v499, %v1466
        %v2068 = vmul.f32 %v500, %v1470
        %v2069 = vmul.f32 %v501, %v1474
        %v2070 = vmul.f32 %v502, %v1478
        %v2071 = vmul.f32 %v503, %v1482
        %v2072 = vmul.f32 %v504, %v1486
        %v2073 = vmul.f32 %v505, %v1490
        %v2074 = vmul.f32 %v506, %v1494
        %v2075 = vmul.f32 %v507, %v1498
        %v2076 = vmul.f32 %v508, %v1502
        %v2077 = vmul.f32 %v509, %v1506
        %v2078 = vmul.f32 %v510, %v1510
        %v2079 = vmul.f32 %v511, %v1514
        %v2080 = vmul.f32 %v512, %v1518
        %v2081 = vmul.f32 %v513, %v1522
        %v2082 = vmul.f32 %v514, %v1526
        %v2083 = vmul.f32 %v515, %v1530
        %v2084 = vmul.f32 %v516, %v1534
        %v2085 = vmul.f32 %v517, %v1538
        %v2086 = vmul.f32 %v518, %v1542
        %v2087 = vmul.f32 %v519, %v1546
        %v2088 = vmul.f32 %v520, %v1550
        %v2089 = vmul.f32 %v521, %v1554
        %v2090 = vmul.f32 %v522, %v1558
        %v2091 = vmul.f32 %v523, %v1562
        %v2092 = vmul.f32 %v524, %v1566
        %v2093 = vmul.f32 %v525, %v1570
        %v2094 = vmul.f32 %v526, %v1574
        %v2095 = vmul.f32 %v527, %v1578
        %v2096 = vmul.f32 %v528, %v1582
        %v2097 = vmul.f32 %v529, %v1586
        %v2098 = vmul.f32 %v530, %v1590
        %v2099 = vmul.f32 %v531, %v1594
        %v2100 = vmul.f32 %v532, %v1598
        %v2101 = vmul.f32 %v533, %v1602
        %v2102 = vmul.f32 %v534, %v1606
        %v2103 = vmul.f32 %v535, %v1610
        %v2104 = vmul.f32 %v536, %v1614
        %v2105 = vmul.f32 %v537, %v1618
        %v2106 = vmul.f32 %v538, %v1622
        %v2107 = vmul.f32 %v539, %v1626
        %v2108 = vmul.f32 %v540, %v1630
        %v2109 = vmul.f32 %v541, %v1634
        %v2110 = vmul.f32 %v542, %v1638
        %v2111 = vmul.f32 %v543, %v1642
        %v2112 = vmul.f32 %v544, %v1646
        %v2113 = vmul.f32 %v545, %v1650
        %v2114 = vmul.f32 %v546, %v1654
        %v2115 = vmul.f32 %v547, %v1658
        %v2116 = vmul.f32 %v548, %v1662
        %v2117 = vmul.f32 %v549, %v1666
        %v2118 = vmul.f32 %v550, %v1670
        %v2119 = vmul.f32 %v551, %v1674
        %v2120 = vmul.f32 %v552, %v1678
        %v2121 = vmul.f32 %v553, %v1682
        %v2122 = vmul.f32 %v554, %v1686
        %v2123 = vmul.f32 %v555, %v1690
        %v2124 = vmul.f32 %v556, %v1694
        %v2125 = vmul.f32 %v557, %v1698
        %v2126 = vmul.f32 %v558, %v1702
        %v2127 = vmul.f32 %v559, %v1706
        %v2128 = vmul.f32 %v560, %v1710
        %v2129 = vmul.f32 %v561, %v1714
        %v2130 = vmul.f32 %v562, %v1718
        %v2131 = vmul.f32 %v563, %v1722
        %v2132 = vmul.f32 %v564, %v1726
        %v2133 = vmul.f32 %v565, %v1730
        %v2134 = vmul.f32 %v566, %v1734
        %v2135 = vmul.f32 %v567, %v1738
        %v2136 = vmul.f32 %v568, %v1742
        %v2137 = vmul.f32 %v569, %v1746
        %v2138 = vmul.f32 %v570, %v1750
        %v2139 = vmul.f32 %v571, %v1754
        %v2140 = vmul.f32 %v572, %v1758
        %v2141 = vmul.f32 %v573, %v1762
        %v2142 = vmul.f32 %v574, %v1766
        %v2143 = vmul.f32 %v575, %v1770
        %v2144 = vmul.f32 %v576, %v1774
        %v2145 = vmul.f32 %v577, %v1778
        %v2146 = vmul.f32 %v578, %v1782
        %v2147 = vmul.f32 %v579, %v1786
        %v2148 = vmul.f32 %v580, %v1790
        %v2149 = vmul.f32 %v581, %v1794
        %v2150 = vmul.f32 %v582, %v1798
        %v2151 = vmul.f32 %v583, %v1802
        %v2152 = vmul.f32 %v584, %v1806
        %v2153 = vmul.f32 %v585, %v1810
        %v2154 = vmul.f32 %v586, %v1814
        %v2155 = vmul.f32 %v587, %v1818
        %v2156 = vmul.f32 %v588, %v1822
        %v2157 = vmul.f32 %v589, %v1826
        %v2158 = vmul.f32 %v590, %v1830
        %v2159 = vmul.f32 %v591, %v1834
        %v2160 = vmul.f32 %v592, %v1838
        %v2161 = vmul.f32 %v593, %v1842
        %v2162 = vmul.f32 %v594, %v1846
        %v2163 = vmul.f32 %v595, %v1850
        %v2164 = vmul.f32 %v596, %v1854
        %v2165 = vmul.f32 %v597, %v1858
        %v2166 = vmul.f32 %v598, %v1862
        %v2167 = vmul.f32 %v599, %v1866
        %v2168 = vmul.f32 %v600, %v1870
        %v2169 = vmul.f32 %v601, %v1874
        %v2170 = vmul.f32 %v602, %v1878
        %v2171 = vmul.f32 %v603, %v1882
        %v2172 = vmul.f32 %v604, %v1886
        %v2173 = vmul.f32 %v605, %v1890
        %v2174 = vmul.f32 %v606, %v1894
        %v2175 = vmul.f32 %v607, %v1898
        %v2176 = vmul.f32 %v608, %v1902
        %v2177 = vmul.f32 %v609, %v1906
        %v2178 = vmul.f32 %v610, %v1910
        %v2179 = vmul.f32 %v611, %v1914
        %v2180 = vmul.f32 %v612, %v1918
        %v2181 = vmul.f32 %v613, %v1922
        %v2182 = vmul.f32 %v614, %v1926
        %vm2183 = vcmask 130048
        %v2184 = vsel %vm2183, %v2055, 0.0
        %2185 = vadd.xlane.f32.xlu0 %v2184
        %v2186 = vpop.xlane.xlu0 %2185
        %v2187 = vsel %vm2183, %v2056, 0.0
        %2188 = vadd.xlane.f32.xlu0 %v2187
        %v2189 = vpop.xlane.xlu0 %2188
        %v2190 = vsel %vm2183, %v2057, 0.0
        %2191 = vadd.xlane.f32.xlu0 %v2190
        %v2192 = vpop.xlane.xlu0 %2191
        %v2193 = vsel %vm2183, %v2058, 0.0
        %2194 = vadd.xlane.f32.xlu0 %v2193
        %v2195 = vpop.xlane.xlu0 %2194
        %v2196 = vsel %vm2183, %v2059, 0.0
        %2197 = vadd.xlane.f32.xlu0 %v2196
        %v2198 = vpop.xlane.xlu0 %2197
        %v2199 = vsel %vm2183, %v2060, 0.0
        %2200 = vadd.xlane.f32.xlu0 %v2199
        %v2201 = vpop.xlane.xlu0 %2200
        %v2202 = vsel %vm2183, %v2061, 0.0
        %2203 = vadd.xlane.f32.xlu0 %v2202
        %v2204 = vpop.xlane.xlu0 %2203
        %v2205 = vsel %vm2183, %v2062, 0.0
        %2206 = vadd.xlane.f32.xlu0 %v2205
        %v2207 = vpop.xlane.xlu0 %2206
        %v2208 = vsel %vm2183, %v2063, 0.0
        %2209 = vadd.xlane.f32.xlu0 %v2208
        %v2210 = vpop.xlane.xlu0 %2209
        %v2211 = vsel %vm2183, %v2064, 0.0
        %2212 = vadd.xlane.f32.xlu0 %v2211
        %v2213 = vpop.xlane.xlu0 %2212
        %v2214 = vsel %vm2183, %v2065, 0.0
        %2215 = vadd.xlane.f32.xlu0 %v2214
        %v2216 = vpop.xlane.xlu0 %2215
        %v2217 = vsel %vm2183, %v2066, 0.0
        %2218 = vadd.xlane.f32.xlu0 %v2217
        %v2219 = vpop.xlane.xlu0 %2218
        %v2220 = vsel %vm2183, %v2067, 0.0
        %2221 = vadd.xlane.f32.xlu0 %v2220
        %v2222 = vpop.xlane.xlu0 %2221
        %v2223 = vsel %vm2183, %v2068, 0.0
        %2224 = vadd.xlane.f32.xlu0 %v2223
        %v2225 = vpop.xlane.xlu0 %2224
        %v2226 = vsel %vm2183, %v2069, 0.0
        %2227 = vadd.xlane.f32.xlu0 %v2226
        %v2228 = vpop.xlane.xlu0 %2227
        %v2229 = vsel %vm2183, %v2070, 0.0
        %2230 = vadd.xlane.f32.xlu0 %v2229
        %v2231 = vpop.xlane.xlu0 %2230
        %v2232 = vsel %vm2183, %v2071, 0.0
        %2233 = vadd.xlane.f32.xlu0 %v2232
        %v2234 = vpop.xlane.xlu0 %2233
        %v2235 = vsel %vm2183, %v2072, 0.0
        %2236 = vadd.xlane.f32.xlu0 %v2235
        %v2237 = vpop.xlane.xlu0 %2236
        %v2238 = vsel %vm2183, %v2073, 0.0
        %2239 = vadd.xlane.f32.xlu0 %v2238
        %v2240 = vpop.xlane.xlu0 %2239
        %v2241 = vsel %vm2183, %v2074, 0.0
        %2242 = vadd.xlane.f32.xlu0 %v2241
        %v2243 = vpop.xlane.xlu0 %2242
        %v2244 = vsel %vm2183, %v2075, 0.0
        %2245 = vadd.xlane.f32.xlu0 %v2244
        %v2246 = vpop.xlane.xlu0 %2245
        %v2247 = vsel %vm2183, %v2076, 0.0
        %2248 = vadd.xlane.f32.xlu0 %v2247
        %v2249 = vpop.xlane.xlu0 %2248
        %v2250 = vsel %vm2183, %v2077, 0.0
        %2251 = vadd.xlane.f32.xlu0 %v2250
        %v2252 = vpop.xlane.xlu0 %2251
        %v2253 = vsel %vm2183, %v2078, 0.0
        %2254 = vadd.xlane.f32.xlu0 %v2253
        %v2255 = vpop.xlane.xlu0 %2254
        %v2256 = vsel %vm2183, %v2079, 0.0
        %2257 = vadd.xlane.f32.xlu0 %v2256
        %v2258 = vpop.xlane.xlu0 %2257
        %v2259 = vsel %vm2183, %v2080, 0.0
        %2260 = vadd.xlane.f32.xlu0 %v2259
        %v2261 = vpop.xlane.xlu0 %2260
        %v2262 = vsel %vm2183, %v2081, 0.0
        %2263 = vadd.xlane.f32.xlu0 %v2262
        %v2264 = vpop.xlane.xlu0 %2263
        %v2265 = vsel %vm2183, %v2082, 0.0
        %2266 = vadd.xlane.f32.xlu0 %v2265
        %v2267 = vpop.xlane.xlu0 %2266
        %v2268 = vsel %vm2183, %v2083, 0.0
        %2269 = vadd.xlane.f32.xlu0 %v2268
        %v2270 = vpop.xlane.xlu0 %2269
        %v2271 = vsel %vm2183, %v2084, 0.0
        %2272 = vadd.xlane.f32.xlu0 %v2271
        %v2273 = vpop.xlane.xlu0 %2272
        %v2274 = vsel %vm2183, %v2085, 0.0
        %2275 = vadd.xlane.f32.xlu0 %v2274
        %v2276 = vpop.xlane.xlu0 %2275
        %v2277 = vsel %vm2183, %v2086, 0.0
        %2278 = vadd.xlane.f32.xlu0 %v2277
        %v2279 = vpop.xlane.xlu0 %2278
        %v2280 = vsel %vm2183, %v2087, 0.0
        %2281 = vadd.xlane.f32.xlu0 %v2280
        %v2282 = vpop.xlane.xlu0 %2281
        %v2283 = vsel %vm2183, %v2088, 0.0
        %2284 = vadd.xlane.f32.xlu0 %v2283
        %v2285 = vpop.xlane.xlu0 %2284
        %v2286 = vsel %vm2183, %v2089, 0.0
        %2287 = vadd.xlane.f32.xlu0 %v2286
        %v2288 = vpop.xlane.xlu0 %2287
        %v2289 = vsel %vm2183, %v2090, 0.0
        %2290 = vadd.xlane.f32.xlu0 %v2289
        %v2291 = vpop.xlane.xlu0 %2290
        %v2292 = vsel %vm2183, %v2091, 0.0
        %2293 = vadd.xlane.f32.xlu0 %v2292
        %v2294 = vpop.xlane.xlu0 %2293
        %v2295 = vsel %vm2183, %v2092, 0.0
        %2296 = vadd.xlane.f32.xlu0 %v2295
        %v2297 = vpop.xlane.xlu0 %2296
        %v2298 = vsel %vm2183, %v2093, 0.0
        %2299 = vadd.xlane.f32.xlu0 %v2298
        %v2300 = vpop.xlane.xlu0 %2299
        %v2301 = vsel %vm2183, %v2094, 0.0
        %2302 = vadd.xlane.f32.xlu0 %v2301
        %v2303 = vpop.xlane.xlu0 %2302
        %v2304 = vsel %vm2183, %v2095, 0.0
        %2305 = vadd.xlane.f32.xlu0 %v2304
        %v2306 = vpop.xlane.xlu0 %2305
        %v2307 = vsel %vm2183, %v2096, 0.0
        %2308 = vadd.xlane.f32.xlu0 %v2307
        %v2309 = vpop.xlane.xlu0 %2308
        %v2310 = vsel %vm2183, %v2097, 0.0
        %2311 = vadd.xlane.f32.xlu0 %v2310
        %v2312 = vpop.xlane.xlu0 %2311
        %v2313 = vsel %vm2183, %v2098, 0.0
        %2314 = vadd.xlane.f32.xlu0 %v2313
        %v2315 = vpop.xlane.xlu0 %2314
        %v2316 = vsel %vm2183, %v2099, 0.0
        %2317 = vadd.xlane.f32.xlu0 %v2316
        %v2318 = vpop.xlane.xlu0 %2317
        %v2319 = vsel %vm2183, %v2100, 0.0
        %2320 = vadd.xlane.f32.xlu0 %v2319
        %v2321 = vpop.xlane.xlu0 %2320
        %v2322 = vsel %vm2183, %v2101, 0.0
        %2323 = vadd.xlane.f32.xlu0 %v2322
        %v2324 = vpop.xlane.xlu0 %2323
        %v2325 = vsel %vm2183, %v2102, 0.0
        %2326 = vadd.xlane.f32.xlu0 %v2325
        %v2327 = vpop.xlane.xlu0 %2326
        %v2328 = vsel %vm2183, %v2103, 0.0
        %2329 = vadd.xlane.f32.xlu0 %v2328
        %v2330 = vpop.xlane.xlu0 %2329
        %v2331 = vsel %vm2183, %v2104, 0.0
        %2332 = vadd.xlane.f32.xlu0 %v2331
        %v2333 = vpop.xlane.xlu0 %2332
        %v2334 = vsel %vm2183, %v2105, 0.0
        %2335 = vadd.xlane.f32.xlu0 %v2334
        %v2336 = vpop.xlane.xlu0 %2335
        %v2337 = vsel %vm2183, %v2106, 0.0
        %2338 = vadd.xlane.f32.xlu0 %v2337
        %v2339 = vpop.xlane.xlu0 %2338
        %v2340 = vsel %vm2183, %v2107, 0.0
        %2341 = vadd.xlane.f32.xlu0 %v2340
        %v2342 = vpop.xlane.xlu0 %2341
        %v2343 = vsel %vm2183, %v2108, 0.0
        %2344 = vadd.xlane.f32.xlu0 %v2343
        %v2345 = vpop.xlane.xlu0 %2344
        %v2346 = vsel %vm2183, %v2109, 0.0
        %2347 = vadd.xlane.f32.xlu0 %v2346
        %v2348 = vpop.xlane.xlu0 %2347
        %v2349 = vsel %vm2183, %v2110, 0.0
        %2350 = vadd.xlane.f32.xlu0 %v2349
        %v2351 = vpop.xlane.xlu0 %2350
        %v2352 = vsel %vm2183, %v2111, 0.0
        %2353 = vadd.xlane.f32.xlu0 %v2352
        %v2354 = vpop.xlane.xlu0 %2353
        %v2355 = vsel %vm2183, %v2112, 0.0
        %2356 = vadd.xlane.f32.xlu0 %v2355
        %v2357 = vpop.xlane.xlu0 %2356
        %v2358 = vsel %vm2183, %v2113, 0.0
        %2359 = vadd.xlane.f32.xlu0 %v2358
        %v2360 = vpop.xlane.xlu0 %2359
        %v2361 = vsel %vm2183, %v2114, 0.0
        %2362 = vadd.xlane.f32.xlu0 %v2361
        %v2363 = vpop.xlane.xlu0 %2362
        %v2364 = vsel %vm2183, %v2115, 0.0
        %2365 = vadd.xlane.f32.xlu0 %v2364
        %v2366 = vpop.xlane.xlu0 %2365
        %v2367 = vsel %vm2183, %v2116, 0.0
        %2368 = vadd.xlane.f32.xlu0 %v2367
        %v2369 = vpop.xlane.xlu0 %2368
        %v2370 = vsel %vm2183, %v2117, 0.0
        %2371 = vadd.xlane.f32.xlu0 %v2370
        %v2372 = vpop.xlane.xlu0 %2371
        %v2373 = vsel %vm2183, %v2118, 0.0
        %2374 = vadd.xlane.f32.xlu0 %v2373
        %v2375 = vpop.xlane.xlu0 %2374
        %v2376 = vsel %vm2183, %v2119, 0.0
        %2377 = vadd.xlane.f32.xlu0 %v2376
        %v2378 = vpop.xlane.xlu0 %2377
        %v2379 = vsel %vm2183, %v2120, 0.0
        %2380 = vadd.xlane.f32.xlu0 %v2379
        %v2381 = vpop.xlane.xlu0 %2380
        %v2382 = vsel %vm2183, %v2121, 0.0
        %2383 = vadd.xlane.f32.xlu0 %v2382
        %v2384 = vpop.xlane.xlu0 %2383
        %v2385 = vsel %vm2183, %v2122, 0.0
        %2386 = vadd.xlane.f32.xlu0 %v2385
        %v2387 = vpop.xlane.xlu0 %2386
        %v2388 = vsel %vm2183, %v2123, 0.0
        %2389 = vadd.xlane.f32.xlu0 %v2388
        %v2390 = vpop.xlane.xlu0 %2389
        %v2391 = vsel %vm2183, %v2124, 0.0
        %2392 = vadd.xlane.f32.xlu0 %v2391
        %v2393 = vpop.xlane.xlu0 %2392
        %v2394 = vsel %vm2183, %v2125, 0.0
        %2395 = vadd.xlane.f32.xlu0 %v2394
        %v2396 = vpop.xlane.xlu0 %2395
        %v2397 = vsel %vm2183, %v2126, 0.0
        %2398 = vadd.xlane.f32.xlu0 %v2397
        %v2399 = vpop.xlane.xlu0 %2398
        %v2400 = vsel %vm2183, %v2127, 0.0
        %2401 = vadd.xlane.f32.xlu0 %v2400
        %v2402 = vpop.xlane.xlu0 %2401
        %v2403 = vsel %vm2183, %v2128, 0.0
        %2404 = vadd.xlane.f32.xlu0 %v2403
        %v2405 = vpop.xlane.xlu0 %2404
        %v2406 = vsel %vm2183, %v2129, 0.0
        %2407 = vadd.xlane.f32.xlu0 %v2406
        %v2408 = vpop.xlane.xlu0 %2407
        %v2409 = vsel %vm2183, %v2130, 0.0
        %2410 = vadd.xlane.f32.xlu0 %v2409
        %v2411 = vpop.xlane.xlu0 %2410
        %v2412 = vsel %vm2183, %v2131, 0.0
        %2413 = vadd.xlane.f32.xlu0 %v2412
        %v2414 = vpop.xlane.xlu0 %2413
        %v2415 = vsel %vm2183, %v2132, 0.0
        %2416 = vadd.xlane.f32.xlu0 %v2415
        %v2417 = vpop.xlane.xlu0 %2416
        %v2418 = vsel %vm2183, %v2133, 0.0
        %2419 = vadd.xlane.f32.xlu0 %v2418
        %v2420 = vpop.xlane.xlu0 %2419
        %v2421 = vsel %vm2183, %v2134, 0.0
        %2422 = vadd.xlane.f32.xlu0 %v2421
        %v2423 = vpop.xlane.xlu0 %2422
        %v2424 = vsel %vm2183, %v2135, 0.0
        %2425 = vadd.xlane.f32.xlu0 %v2424
        %v2426 = vpop.xlane.xlu0 %2425
        %v2427 = vsel %vm2183, %v2136, 0.0
        %2428 = vadd.xlane.f32.xlu0 %v2427
        %v2429 = vpop.xlane.xlu0 %2428
        %v2430 = vsel %vm2183, %v2137, 0.0
        %2431 = vadd.xlane.f32.xlu0 %v2430
        %v2432 = vpop.xlane.xlu0 %2431
        %v2433 = vsel %vm2183, %v2138, 0.0
        %2434 = vadd.xlane.f32.xlu0 %v2433
        %v2435 = vpop.xlane.xlu0 %2434
        %v2436 = vsel %vm2183, %v2139, 0.0
        %2437 = vadd.xlane.f32.xlu0 %v2436
        %v2438 = vpop.xlane.xlu0 %2437
        %v2439 = vsel %vm2183, %v2140, 0.0
        %2440 = vadd.xlane.f32.xlu0 %v2439
        %v2441 = vpop.xlane.xlu0 %2440
        %v2442 = vsel %vm2183, %v2141, 0.0
        %2443 = vadd.xlane.f32.xlu0 %v2442
        %v2444 = vpop.xlane.xlu0 %2443
        %v2445 = vsel %vm2183, %v2142, 0.0
        %2446 = vadd.xlane.f32.xlu0 %v2445
        %v2447 = vpop.xlane.xlu0 %2446
        %v2448 = vsel %vm2183, %v2143, 0.0
        %2449 = vadd.xlane.f32.xlu0 %v2448
        %v2450 = vpop.xlane.xlu0 %2449
        %v2451 = vsel %vm2183, %v2144, 0.0
        %2452 = vadd.xlane.f32.xlu0 %v2451
        %v2453 = vpop.xlane.xlu0 %2452
        %v2454 = vsel %vm2183, %v2145, 0.0
        %2455 = vadd.xlane.f32.xlu0 %v2454
        %v2456 = vpop.xlane.xlu0 %2455
        %v2457 = vsel %vm2183, %v2146, 0.0
        %2458 = vadd.xlane.f32.xlu0 %v2457
        %v2459 = vpop.xlane.xlu0 %2458
        %v2460 = vsel %vm2183, %v2147, 0.0
        %2461 = vadd.xlane.f32.xlu0 %v2460
        %v2462 = vpop.xlane.xlu0 %2461
        %v2463 = vsel %vm2183, %v2148, 0.0
        %2464 = vadd.xlane.f32.xlu0 %v2463
        %v2465 = vpop.xlane.xlu0 %2464
        %v2466 = vsel %vm2183, %v2149, 0.0
        %2467 = vadd.xlane.f32.xlu0 %v2466
        %v2468 = vpop.xlane.xlu0 %2467
        %v2469 = vsel %vm2183, %v2150, 0.0
        %2470 = vadd.xlane.f32.xlu0 %v2469
        %v2471 = vpop.xlane.xlu0 %2470
        %v2472 = vsel %vm2183, %v2151, 0.0
        %2473 = vadd.xlane.f32.xlu0 %v2472
        %v2474 = vpop.xlane.xlu0 %2473
        %v2475 = vsel %vm2183, %v2152, 0.0
        %2476 = vadd.xlane.f32.xlu0 %v2475
        %v2477 = vpop.xlane.xlu0 %2476
        %v2478 = vsel %vm2183, %v2153, 0.0
        %2479 = vadd.xlane.f32.xlu0 %v2478
        %v2480 = vpop.xlane.xlu0 %2479
        %v2481 = vsel %vm2183, %v2154, 0.0
        %2482 = vadd.xlane.f32.xlu0 %v2481
        %v2483 = vpop.xlane.xlu0 %2482
        %v2484 = vsel %vm2183, %v2155, 0.0
        %2485 = vadd.xlane.f32.xlu0 %v2484
        %v2486 = vpop.xlane.xlu0 %2485
        %v2487 = vsel %vm2183, %v2156, 0.0
        %2488 = vadd.xlane.f32.xlu0 %v2487
        %v2489 = vpop.xlane.xlu0 %2488
        %v2490 = vsel %vm2183, %v2157, 0.0
        %2491 = vadd.xlane.f32.xlu0 %v2490
        %v2492 = vpop.xlane.xlu0 %2491
        %v2493 = vsel %vm2183, %v2158, 0.0
        %2494 = vadd.xlane.f32.xlu0 %v2493
        %v2495 = vpop.xlane.xlu0 %2494
        %v2496 = vsel %vm2183, %v2159, 0.0
        %2497 = vadd.xlane.f32.xlu0 %v2496
        %v2498 = vpop.xlane.xlu0 %2497
        %v2499 = vsel %vm2183, %v2160, 0.0
        %2500 = vadd.xlane.f32.xlu0 %v2499
        %v2501 = vpop.xlane.xlu0 %2500
        %v2502 = vsel %vm2183, %v2161, 0.0
        %2503 = vadd.xlane.f32.xlu0 %v2502
        %v2504 = vpop.xlane.xlu0 %2503
        %v2505 = vsel %vm2183, %v2162, 0.0
        %2506 = vadd.xlane.f32.xlu0 %v2505
        %v2507 = vpop.xlane.xlu0 %2506
        %v2508 = vsel %vm2183, %v2163, 0.0
        %2509 = vadd.xlane.f32.xlu0 %v2508
        %v2510 = vpop.xlane.xlu0 %2509
        %v2511 = vsel %vm2183, %v2164, 0.0
        %2512 = vadd.xlane.f32.xlu0 %v2511
        %v2513 = vpop.xlane.xlu0 %2512
        %v2514 = vsel %vm2183, %v2165, 0.0
        %2515 = vadd.xlane.f32.xlu0 %v2514
        %v2516 = vpop.xlane.xlu0 %2515
        %v2517 = vsel %vm2183, %v2166, 0.0
        %2518 = vadd.xlane.f32.xlu0 %v2517
        %v2519 = vpop.xlane.xlu0 %2518
        %v2520 = vsel %vm2183, %v2167, 0.0
        %2521 = vadd.xlane.f32.xlu0 %v2520
        %v2522 = vpop.xlane.xlu0 %2521
        %v2523 = vsel %vm2183, %v2168, 0.0
        %2524 = vadd.xlane.f32.xlu0 %v2523
        %v2525 = vpop.xlane.xlu0 %2524
        %v2526 = vsel %vm2183, %v2169, 0.0
        %2527 = vadd.xlane.f32.xlu0 %v2526
        %v2528 = vpop.xlane.xlu0 %2527
        %v2529 = vsel %vm2183, %v2170, 0.0
        %2530 = vadd.xlane.f32.xlu0 %v2529
        %v2531 = vpop.xlane.xlu0 %2530
        %v2532 = vsel %vm2183, %v2171, 0.0
        %2533 = vadd.xlane.f32.xlu0 %v2532
        %v2534 = vpop.xlane.xlu0 %2533
        %v2535 = vsel %vm2183, %v2172, 0.0
        %2536 = vadd.xlane.f32.xlu0 %v2535
        %v2537 = vpop.xlane.xlu0 %2536
        %v2538 = vsel %vm2183, %v2173, 0.0
        %2539 = vadd.xlane.f32.xlu0 %v2538
        %v2540 = vpop.xlane.xlu0 %2539
        %v2541 = vsel %vm2183, %v2174, 0.0
        %2542 = vadd.xlane.f32.xlu0 %v2541
        %v2543 = vpop.xlane.xlu0 %2542
        %v2544 = vsel %vm2183, %v2175, 0.0
        %2545 = vadd.xlane.f32.xlu0 %v2544
        %v2546 = vpop.xlane.xlu0 %2545
        %v2547 = vsel %vm2183, %v2176, 0.0
        %2548 = vadd.xlane.f32.xlu0 %v2547
        %v2549 = vpop.xlane.xlu0 %2548
        %v2550 = vsel %vm2183, %v2177, 0.0
        %2551 = vadd.xlane.f32.xlu0 %v2550
        %v2552 = vpop.xlane.xlu0 %2551
        %v2553 = vsel %vm2183, %v2178, 0.0
        %2554 = vadd.xlane.f32.xlu0 %v2553
        %v2555 = vpop.xlane.xlu0 %2554
        %v2556 = vsel %vm2183, %v2179, 0.0
        %2557 = vadd.xlane.f32.xlu0 %v2556
        %v2558 = vpop.xlane.xlu0 %2557
        %v2559 = vsel %vm2183, %v2180, 0.0
        %2560 = vadd.xlane.f32.xlu0 %v2559
        %v2561 = vpop.xlane.xlu0 %2560
        %v2562 = vsel %vm2183, %v2181, 0.0
        %2563 = vadd.xlane.f32.xlu0 %v2562
        %v2564 = vpop.xlane.xlu0 %2563
        %v2565 = vsel %vm2183, %v2182, 0.0
        %2566 = vadd.xlane.f32.xlu0 %v2565
        %v2567 = vpop.xlane.xlu0 %2566
        %v2696 = vlaneseq
        %v2697 = vshrl.u32 %v2696, 7
        %v2698 = vsub.s32 %v190, %v2697
        %v2699 = vrot.slane %v2186, %v2698
        %v2700 = vlaneseq
        %v2701 = vshrl.u32 %v2700, 7
        %v2702 = vsub.s32 %v190, %v2701
        %v2703 = vrot.slane %v2189, %v2702
        %v2704 = vlaneseq
        %v2705 = vshrl.u32 %v2704, 7
        %v2706 = vsub.s32 %v190, %v2705
        %v2707 = vrot.slane %v2192, %v2706
        %v2708 = vlaneseq
        %v2709 = vshrl.u32 %v2708, 7
        %v2710 = vsub.s32 %v190, %v2709
        %v2711 = vrot.slane %v2195, %v2710
        %v2712 = vlaneseq
        %v2713 = vshrl.u32 %v2712, 7
        %v2714 = vsub.s32 %v190, %v2713
        %v2715 = vrot.slane %v2198, %v2714
        %v2716 = vlaneseq
        %v2717 = vshrl.u32 %v2716, 7
        %v2718 = vsub.s32 %v190, %v2717
        %v2719 = vrot.slane %v2201, %v2718
        %v2720 = vlaneseq
        %v2721 = vshrl.u32 %v2720, 7
        %v2722 = vsub.s32 %v190, %v2721
        %v2723 = vrot.slane %v2204, %v2722
        %v2724 = vlaneseq
        %v2725 = vshrl.u32 %v2724, 7
        %v2726 = vsub.s32 %v190, %v2725
        %v2727 = vrot.slane %v2207, %v2726
        %v2728 = vlaneseq
        %v2729 = vshrl.u32 %v2728, 7
        %v2730 = vsub.s32 %v190, %v2729
        %v2731 = vrot.slane %v2210, %v2730
        %v2732 = vlaneseq
        %v2733 = vshrl.u32 %v2732, 7
        %v2734 = vsub.s32 %v190, %v2733
        %v2735 = vrot.slane %v2213, %v2734
        %v2736 = vlaneseq
        %v2737 = vshrl.u32 %v2736, 7
        %v2738 = vsub.s32 %v190, %v2737
        %v2739 = vrot.slane %v2216, %v2738
        %v2740 = vlaneseq
        %v2741 = vshrl.u32 %v2740, 7
        %v2742 = vsub.s32 %v190, %v2741
        %v2743 = vrot.slane %v2219, %v2742
        %v2744 = vlaneseq
        %v2745 = vshrl.u32 %v2744, 7
        %v2746 = vsub.s32 %v190, %v2745
        %v2747 = vrot.slane %v2222, %v2746
        %v2748 = vlaneseq
        %v2749 = vshrl.u32 %v2748, 7
        %v2750 = vsub.s32 %v190, %v2749
        %v2751 = vrot.slane %v2225, %v2750
        %v2752 = vlaneseq
        %v2753 = vshrl.u32 %v2752, 7
        %v2754 = vsub.s32 %v190, %v2753
        %v2755 = vrot.slane %v2228, %v2754
        %v2756 = vlaneseq
        %v2757 = vshrl.u32 %v2756, 7
        %v2758 = vsub.s32 %v190, %v2757
        %v2759 = vrot.slane %v2231, %v2758
        %v2760 = vlaneseq
        %v2761 = vshrl.u32 %v2760, 7
        %v2762 = vsub.s32 %v190, %v2761
        %v2763 = vrot.slane %v2234, %v2762
        %v2764 = vlaneseq
        %v2765 = vshrl.u32 %v2764, 7
        %v2766 = vsub.s32 %v190, %v2765
        %v2767 = vrot.slane %v2237, %v2766
        %v2768 = vlaneseq
        %v2769 = vshrl.u32 %v2768, 7
        %v2770 = vsub.s32 %v190, %v2769
        %v2771 = vrot.slane %v2240, %v2770
        %v2772 = vlaneseq
        %v2773 = vshrl.u32 %v2772, 7
        %v2774 = vsub.s32 %v190, %v2773
        %v2775 = vrot.slane %v2243, %v2774
        %v2776 = vlaneseq
        %v2777 = vshrl.u32 %v2776, 7
        %v2778 = vsub.s32 %v190, %v2777
        %v2779 = vrot.slane %v2246, %v2778
        %v2780 = vlaneseq
        %v2781 = vshrl.u32 %v2780, 7
        %v2782 = vsub.s32 %v190, %v2781
        %v2783 = vrot.slane %v2249, %v2782
        %v2784 = vlaneseq
        %v2785 = vshrl.u32 %v2784, 7
        %v2786 = vsub.s32 %v190, %v2785
        %v2787 = vrot.slane %v2252, %v2786
        %v2788 = vlaneseq
        %v2789 = vshrl.u32 %v2788, 7
        %v2790 = vsub.s32 %v190, %v2789
        %v2791 = vrot.slane %v2255, %v2790
        %v2792 = vlaneseq
        %v2793 = vshrl.u32 %v2792, 7
        %v2794 = vsub.s32 %v190, %v2793
        %v2795 = vrot.slane %v2258, %v2794
        %v2796 = vlaneseq
        %v2797 = vshrl.u32 %v2796, 7
        %v2798 = vsub.s32 %v190, %v2797
        %v2799 = vrot.slane %v2261, %v2798
        %v2800 = vlaneseq
        %v2801 = vshrl.u32 %v2800, 7
        %v2802 = vsub.s32 %v190, %v2801
        %v2803 = vrot.slane %v2264, %v2802
        %v2804 = vlaneseq
        %v2805 = vshrl.u32 %v2804, 7
        %v2806 = vsub.s32 %v190, %v2805
        %v2807 = vrot.slane %v2267, %v2806
        %v2808 = vlaneseq
        %v2809 = vshrl.u32 %v2808, 7
        %v2810 = vsub.s32 %v190, %v2809
        %v2811 = vrot.slane %v2270, %v2810
        %v2812 = vlaneseq
        %v2813 = vshrl.u32 %v2812, 7
        %v2814 = vsub.s32 %v190, %v2813
        %v2815 = vrot.slane %v2273, %v2814
        %v2816 = vlaneseq
        %v2817 = vshrl.u32 %v2816, 7
        %v2818 = vsub.s32 %v190, %v2817
        %v2819 = vrot.slane %v2276, %v2818
        %v2820 = vlaneseq
        %v2821 = vshrl.u32 %v2820, 7
        %v2822 = vsub.s32 %v190, %v2821
        %v2823 = vrot.slane %v2279, %v2822
        %v2824 = vlaneseq
        %v2825 = vshrl.u32 %v2824, 7
        %v2826 = vsub.s32 %v190, %v2825
        %v2827 = vrot.slane %v2282, %v2826
        %v2828 = vlaneseq
        %v2829 = vshrl.u32 %v2828, 7
        %v2830 = vsub.s32 %v190, %v2829
        %v2831 = vrot.slane %v2285, %v2830
        %v2832 = vlaneseq
        %v2833 = vshrl.u32 %v2832, 7
        %v2834 = vsub.s32 %v190, %v2833
        %v2835 = vrot.slane %v2288, %v2834
        %v2836 = vlaneseq
        %v2837 = vshrl.u32 %v2836, 7
        %v2838 = vsub.s32 %v190, %v2837
        %v2839 = vrot.slane %v2291, %v2838
        %v2840 = vlaneseq
        %v2841 = vshrl.u32 %v2840, 7
        %v2842 = vsub.s32 %v190, %v2841
        %v2843 = vrot.slane %v2294, %v2842
        %v2844 = vlaneseq
        %v2845 = vshrl.u32 %v2844, 7
        %v2846 = vsub.s32 %v190, %v2845
        %v2847 = vrot.slane %v2297, %v2846
        %v2848 = vlaneseq
        %v2849 = vshrl.u32 %v2848, 7
        %v2850 = vsub.s32 %v190, %v2849
        %v2851 = vrot.slane %v2300, %v2850
        %v2852 = vlaneseq
        %v2853 = vshrl.u32 %v2852, 7
        %v2854 = vsub.s32 %v190, %v2853
        %v2855 = vrot.slane %v2303, %v2854
        %v2856 = vlaneseq
        %v2857 = vshrl.u32 %v2856, 7
        %v2858 = vsub.s32 %v190, %v2857
        %v2859 = vrot.slane %v2306, %v2858
        %v2860 = vlaneseq
        %v2861 = vshrl.u32 %v2860, 7
        %v2862 = vsub.s32 %v190, %v2861
        %v2863 = vrot.slane %v2309, %v2862
        %v2864 = vlaneseq
        %v2865 = vshrl.u32 %v2864, 7
        %v2866 = vsub.s32 %v190, %v2865
        %v2867 = vrot.slane %v2312, %v2866
        %v2868 = vlaneseq
        %v2869 = vshrl.u32 %v2868, 7
        %v2870 = vsub.s32 %v190, %v2869
        %v2871 = vrot.slane %v2315, %v2870
        %v2872 = vlaneseq
        %v2873 = vshrl.u32 %v2872, 7
        %v2874 = vsub.s32 %v190, %v2873
        %v2875 = vrot.slane %v2318, %v2874
        %v2876 = vlaneseq
        %v2877 = vshrl.u32 %v2876, 7
        %v2878 = vsub.s32 %v190, %v2877
        %v2879 = vrot.slane %v2321, %v2878
        %v2880 = vlaneseq
        %v2881 = vshrl.u32 %v2880, 7
        %v2882 = vsub.s32 %v190, %v2881
        %v2883 = vrot.slane %v2324, %v2882
        %v2884 = vlaneseq
        %v2885 = vshrl.u32 %v2884, 7
        %v2886 = vsub.s32 %v190, %v2885
        %v2887 = vrot.slane %v2327, %v2886
        %v2888 = vlaneseq
        %v2889 = vshrl.u32 %v2888, 7
        %v2890 = vsub.s32 %v190, %v2889
        %v2891 = vrot.slane %v2330, %v2890
        %v2892 = vlaneseq
        %v2893 = vshrl.u32 %v2892, 7
        %v2894 = vsub.s32 %v190, %v2893
        %v2895 = vrot.slane %v2333, %v2894
        %v2896 = vlaneseq
        %v2897 = vshrl.u32 %v2896, 7
        %v2898 = vsub.s32 %v190, %v2897
        %v2899 = vrot.slane %v2336, %v2898
        %v2900 = vlaneseq
        %v2901 = vshrl.u32 %v2900, 7
        %v2902 = vsub.s32 %v190, %v2901
        %v2903 = vrot.slane %v2339, %v2902
        %v2904 = vlaneseq
        %v2905 = vshrl.u32 %v2904, 7
        %v2906 = vsub.s32 %v190, %v2905
        %v2907 = vrot.slane %v2342, %v2906
        %v2908 = vlaneseq
        %v2909 = vshrl.u32 %v2908, 7
        %v2910 = vsub.s32 %v190, %v2909
        %v2911 = vrot.slane %v2345, %v2910
        %v2912 = vlaneseq
        %v2913 = vshrl.u32 %v2912, 7
        %v2914 = vsub.s32 %v190, %v2913
        %v2915 = vrot.slane %v2348, %v2914
        %v2916 = vlaneseq
        %v2917 = vshrl.u32 %v2916, 7
        %v2918 = vsub.s32 %v190, %v2917
        %v2919 = vrot.slane %v2351, %v2918
        %v2920 = vlaneseq
        %v2921 = vshrl.u32 %v2920, 7
        %v2922 = vsub.s32 %v190, %v2921
        %v2923 = vrot.slane %v2354, %v2922
        %v2924 = vlaneseq
        %v2925 = vshrl.u32 %v2924, 7
        %v2926 = vsub.s32 %v190, %v2925
        %v2927 = vrot.slane %v2357, %v2926
        %v2928 = vlaneseq
        %v2929 = vshrl.u32 %v2928, 7
        %v2930 = vsub.s32 %v190, %v2929
        %v2931 = vrot.slane %v2360, %v2930
        %v2932 = vlaneseq
        %v2933 = vshrl.u32 %v2932, 7
        %v2934 = vsub.s32 %v190, %v2933
        %v2935 = vrot.slane %v2363, %v2934
        %v2936 = vlaneseq
        %v2937 = vshrl.u32 %v2936, 7
        %v2938 = vsub.s32 %v190, %v2937
        %v2939 = vrot.slane %v2366, %v2938
        %v2940 = vlaneseq
        %v2941 = vshrl.u32 %v2940, 7
        %v2942 = vsub.s32 %v190, %v2941
        %v2943 = vrot.slane %v2369, %v2942
        %v2944 = vlaneseq
        %v2945 = vshrl.u32 %v2944, 7
        %v2946 = vsub.s32 %v190, %v2945
        %v2947 = vrot.slane %v2372, %v2946
        %v2948 = vlaneseq
        %v2949 = vshrl.u32 %v2948, 7
        %v2950 = vsub.s32 %v190, %v2949
        %v2951 = vrot.slane %v2375, %v2950
        %v2952 = vlaneseq
        %v2953 = vshrl.u32 %v2952, 7
        %v2954 = vsub.s32 %v190, %v2953
        %v2955 = vrot.slane %v2378, %v2954
        %v2956 = vlaneseq
        %v2957 = vshrl.u32 %v2956, 7
        %v2958 = vsub.s32 %v190, %v2957
        %v2959 = vrot.slane %v2381, %v2958
        %v2960 = vlaneseq
        %v2961 = vshrl.u32 %v2960, 7
        %v2962 = vsub.s32 %v190, %v2961
        %v2963 = vrot.slane %v2384, %v2962
        %v2964 = vlaneseq
        %v2965 = vshrl.u32 %v2964, 7
        %v2966 = vsub.s32 %v190, %v2965
        %v2967 = vrot.slane %v2387, %v2966
        %v2968 = vlaneseq
        %v2969 = vshrl.u32 %v2968, 7
        %v2970 = vsub.s32 %v190, %v2969
        %v2971 = vrot.slane %v2390, %v2970
        %v2972 = vlaneseq
        %v2973 = vshrl.u32 %v2972, 7
        %v2974 = vsub.s32 %v190, %v2973
        %v2975 = vrot.slane %v2393, %v2974
        %v2976 = vlaneseq
        %v2977 = vshrl.u32 %v2976, 7
        %v2978 = vsub.s32 %v190, %v2977
        %v2979 = vrot.slane %v2396, %v2978
        %v2980 = vlaneseq
        %v2981 = vshrl.u32 %v2980, 7
        %v2982 = vsub.s32 %v190, %v2981
        %v2983 = vrot.slane %v2399, %v2982
        %v2984 = vlaneseq
        %v2985 = vshrl.u32 %v2984, 7
        %v2986 = vsub.s32 %v190, %v2985
        %v2987 = vrot.slane %v2402, %v2986
        %v2988 = vlaneseq
        %v2989 = vshrl.u32 %v2988, 7
        %v2990 = vsub.s32 %v190, %v2989
        %v2991 = vrot.slane %v2405, %v2990
        %v2992 = vlaneseq
        %v2993 = vshrl.u32 %v2992, 7
        %v2994 = vsub.s32 %v190, %v2993
        %v2995 = vrot.slane %v2408, %v2994
        %v2996 = vlaneseq
        %v2997 = vshrl.u32 %v2996, 7
        %v2998 = vsub.s32 %v190, %v2997
        %v2999 = vrot.slane %v2411, %v2998
        %v3000 = vlaneseq
        %v3001 = vshrl.u32 %v3000, 7
        %v3002 = vsub.s32 %v190, %v3001
        %v3003 = vrot.slane %v2414, %v3002
        %v3004 = vlaneseq
        %v3005 = vshrl.u32 %v3004, 7
        %v3006 = vsub.s32 %v190, %v3005
        %v3007 = vrot.slane %v2417, %v3006
        %v3008 = vlaneseq
        %v3009 = vshrl.u32 %v3008, 7
        %v3010 = vsub.s32 %v190, %v3009
        %v3011 = vrot.slane %v2420, %v3010
        %v3012 = vlaneseq
        %v3013 = vshrl.u32 %v3012, 7
        %v3014 = vsub.s32 %v190, %v3013
        %v3015 = vrot.slane %v2423, %v3014
        %v3016 = vlaneseq
        %v3017 = vshrl.u32 %v3016, 7
        %v3018 = vsub.s32 %v190, %v3017
        %v3019 = vrot.slane %v2426, %v3018
        %v3020 = vlaneseq
        %v3021 = vshrl.u32 %v3020, 7
        %v3022 = vsub.s32 %v190, %v3021
        %v3023 = vrot.slane %v2429, %v3022
        %v3024 = vlaneseq
        %v3025 = vshrl.u32 %v3024, 7
        %v3026 = vsub.s32 %v190, %v3025
        %v3027 = vrot.slane %v2432, %v3026
        %v3028 = vlaneseq
        %v3029 = vshrl.u32 %v3028, 7
        %v3030 = vsub.s32 %v190, %v3029
        %v3031 = vrot.slane %v2435, %v3030
        %v3032 = vlaneseq
        %v3033 = vshrl.u32 %v3032, 7
        %v3034 = vsub.s32 %v190, %v3033
        %v3035 = vrot.slane %v2438, %v3034
        %v3036 = vlaneseq
        %v3037 = vshrl.u32 %v3036, 7
        %v3038 = vsub.s32 %v190, %v3037
        %v3039 = vrot.slane %v2441, %v3038
        %v3040 = vlaneseq
        %v3041 = vshrl.u32 %v3040, 7
        %v3042 = vsub.s32 %v190, %v3041
        %v3043 = vrot.slane %v2444, %v3042
        %v3044 = vlaneseq
        %v3045 = vshrl.u32 %v3044, 7
        %v3046 = vsub.s32 %v190, %v3045
        %v3047 = vrot.slane %v2447, %v3046
        %v3048 = vlaneseq
        %v3049 = vshrl.u32 %v3048, 7
        %v3050 = vsub.s32 %v190, %v3049
        %v3051 = vrot.slane %v2450, %v3050
        %v3052 = vlaneseq
        %v3053 = vshrl.u32 %v3052, 7
        %v3054 = vsub.s32 %v190, %v3053
        %v3055 = vrot.slane %v2453, %v3054
        %v3056 = vlaneseq
        %v3057 = vshrl.u32 %v3056, 7
        %v3058 = vsub.s32 %v190, %v3057
        %v3059 = vrot.slane %v2456, %v3058
        %v3060 = vlaneseq
        %v3061 = vshrl.u32 %v3060, 7
        %v3062 = vsub.s32 %v190, %v3061
        %v3063 = vrot.slane %v2459, %v3062
        %v3064 = vlaneseq
        %v3065 = vshrl.u32 %v3064, 7
        %v3066 = vsub.s32 %v190, %v3065
        %v3067 = vrot.slane %v2462, %v3066
        %v3068 = vlaneseq
        %v3069 = vshrl.u32 %v3068, 7
        %v3070 = vsub.s32 %v190, %v3069
        %v3071 = vrot.slane %v2465, %v3070
        %v3072 = vlaneseq
        %v3073 = vshrl.u32 %v3072, 7
        %v3074 = vsub.s32 %v190, %v3073
        %v3075 = vrot.slane %v2468, %v3074
        %v3076 = vlaneseq
        %v3077 = vshrl.u32 %v3076, 7
        %v3078 = vsub.s32 %v190, %v3077
        %v3079 = vrot.slane %v2471, %v3078
        %v3080 = vlaneseq
        %v3081 = vshrl.u32 %v3080, 7
        %v3082 = vsub.s32 %v190, %v3081
        %v3083 = vrot.slane %v2474, %v3082
        %v3084 = vlaneseq
        %v3085 = vshrl.u32 %v3084, 7
        %v3086 = vsub.s32 %v190, %v3085
        %v3087 = vrot.slane %v2477, %v3086
        %v3088 = vlaneseq
        %v3089 = vshrl.u32 %v3088, 7
        %v3090 = vsub.s32 %v190, %v3089
        %v3091 = vrot.slane %v2480, %v3090
        %v3092 = vlaneseq
        %v3093 = vshrl.u32 %v3092, 7
        %v3094 = vsub.s32 %v190, %v3093
        %v3095 = vrot.slane %v2483, %v3094
        %v3096 = vlaneseq
        %v3097 = vshrl.u32 %v3096, 7
        %v3098 = vsub.s32 %v190, %v3097
        %v3099 = vrot.slane %v2486, %v3098
        %v3100 = vlaneseq
        %v3101 = vshrl.u32 %v3100, 7
        %v3102 = vsub.s32 %v190, %v3101
        %v3103 = vrot.slane %v2489, %v3102
        %v3104 = vlaneseq
        %v3105 = vshrl.u32 %v3104, 7
        %v3106 = vsub.s32 %v190, %v3105
        %v3107 = vrot.slane %v2492, %v3106
        %v3108 = vlaneseq
        %v3109 = vshrl.u32 %v3108, 7
        %v3110 = vsub.s32 %v190, %v3109
        %v3111 = vrot.slane %v2495, %v3110
        %v3112 = vlaneseq
        %v3113 = vshrl.u32 %v3112, 7
        %v3114 = vsub.s32 %v190, %v3113
        %v3115 = vrot.slane %v2498, %v3114
        %v3116 = vlaneseq
        %v3117 = vshrl.u32 %v3116, 7
        %v3118 = vsub.s32 %v190, %v3117
        %v3119 = vrot.slane %v2501, %v3118
        %v3120 = vlaneseq
        %v3121 = vshrl.u32 %v3120, 7
        %v3122 = vsub.s32 %v190, %v3121
        %v3123 = vrot.slane %v2504, %v3122
        %v3124 = vlaneseq
        %v3125 = vshrl.u32 %v3124, 7
        %v3126 = vsub.s32 %v190, %v3125
        %v3127 = vrot.slane %v2507, %v3126
        %v3128 = vlaneseq
        %v3129 = vshrl.u32 %v3128, 7
        %v3130 = vsub.s32 %v190, %v3129
        %v3131 = vrot.slane %v2510, %v3130
        %v3132 = vlaneseq
        %v3133 = vshrl.u32 %v3132, 7
        %v3134 = vsub.s32 %v190, %v3133
        %v3135 = vrot.slane %v2513, %v3134
        %v3136 = vlaneseq
        %v3137 = vshrl.u32 %v3136, 7
        %v3138 = vsub.s32 %v190, %v3137
        %v3139 = vrot.slane %v2516, %v3138
        %v3140 = vlaneseq
        %v3141 = vshrl.u32 %v3140, 7
        %v3142 = vsub.s32 %v190, %v3141
        %v3143 = vrot.slane %v2519, %v3142
        %v3144 = vlaneseq
        %v3145 = vshrl.u32 %v3144, 7
        %v3146 = vsub.s32 %v190, %v3145
        %v3147 = vrot.slane %v2522, %v3146
        %v3148 = vlaneseq
        %v3149 = vshrl.u32 %v3148, 7
        %v3150 = vsub.s32 %v190, %v3149
        %v3151 = vrot.slane %v2525, %v3150
        %v3152 = vlaneseq
        %v3153 = vshrl.u32 %v3152, 7
        %v3154 = vsub.s32 %v190, %v3153
        %v3155 = vrot.slane %v2528, %v3154
        %v3156 = vlaneseq
        %v3157 = vshrl.u32 %v3156, 7
        %v3158 = vsub.s32 %v190, %v3157
        %v3159 = vrot.slane %v2531, %v3158
        %v3160 = vlaneseq
        %v3161 = vshrl.u32 %v3160, 7
        %v3162 = vsub.s32 %v190, %v3161
        %v3163 = vrot.slane %v2534, %v3162
        %v3164 = vlaneseq
        %v3165 = vshrl.u32 %v3164, 7
        %v3166 = vsub.s32 %v190, %v3165
        %v3167 = vrot.slane %v2537, %v3166
        %v3168 = vlaneseq
        %v3169 = vshrl.u32 %v3168, 7
        %v3170 = vsub.s32 %v190, %v3169
        %v3171 = vrot.slane %v2540, %v3170
        %v3172 = vlaneseq
        %v3173 = vshrl.u32 %v3172, 7
        %v3174 = vsub.s32 %v190, %v3173
        %v3175 = vrot.slane %v2543, %v3174
        %v3176 = vlaneseq
        %v3177 = vshrl.u32 %v3176, 7
        %v3178 = vsub.s32 %v190, %v3177
        %v3179 = vrot.slane %v2546, %v3178
        %v3180 = vlaneseq
        %v3181 = vshrl.u32 %v3180, 7
        %v3182 = vsub.s32 %v190, %v3181
        %v3183 = vrot.slane %v2549, %v3182
        %v3184 = vlaneseq
        %v3185 = vshrl.u32 %v3184, 7
        %v3186 = vsub.s32 %v190, %v3185
        %v3187 = vrot.slane %v2552, %v3186
        %v3188 = vlaneseq
        %v3189 = vshrl.u32 %v3188, 7
        %v3190 = vsub.s32 %v190, %v3189
        %v3191 = vrot.slane %v2555, %v3190
        %v3192 = vlaneseq
        %v3193 = vshrl.u32 %v3192, 7
        %v3194 = vsub.s32 %v190, %v3193
        %v3195 = vrot.slane %v2558, %v3194
        %v3196 = vlaneseq
        %v3197 = vshrl.u32 %v3196, 7
        %v3198 = vsub.s32 %v190, %v3197
        %v3199 = vrot.slane %v2561, %v3198
        %v3200 = vlaneseq
        %v3201 = vshrl.u32 %v3200, 7
        %v3202 = vsub.s32 %v190, %v3201
        %v3203 = vrot.slane %v2564, %v3202
        %v3204 = vlaneseq
        %v3205 = vshrl.u32 %v3204, 7
        %v3206 = vsub.s32 %v190, %v3205
        %v3207 = vrot.slane %v2567, %v3206
        %vm3208 = vcmask 1041409
        %v3209 = vsel %vm3208, %v2703, %v2699
        %vm3210 = vcmask 1042434
        %v3211 = vsel %vm3210, %v2707, %v3209
        %vm3212 = vcmask 1043459
        %v3213 = vsel %vm3212, %v2711, %v3211
        %vm3214 = vcmask 1044484
        %v3215 = vsel %vm3214, %v2715, %v3213
        %vm3216 = vcmask 1045509
        %v3217 = vsel %vm3216, %v2719, %v3215
        %vm3218 = vcmask 1046534
        %v3219 = vsel %vm3218, %v2723, %v3217
        %vm3220 = vcmask 1047559
        %v3221 = vsel %vm3220, %v2727, %v3219
        %v3222 = vsel %vm3208, %v2735, %v2731
        %v3223 = vsel %vm3210, %v2739, %v3222
        %v3224 = vsel %vm3212, %v2743, %v3223
        %v3225 = vsel %vm3214, %v2747, %v3224
        %v3226 = vsel %vm3216, %v2751, %v3225
        %v3227 = vsel %vm3218, %v2755, %v3226
        %v3228 = vsel %vm3220, %v2759, %v3227
        %v3229 = vsel %vm3208, %v2767, %v2763
        %v3230 = vsel %vm3210, %v2771, %v3229
        %v3231 = vsel %vm3212, %v2775, %v3230
        %v3232 = vsel %vm3214, %v2779, %v3231
        %v3233 = vsel %vm3216, %v2783, %v3232
        %v3234 = vsel %vm3218, %v2787, %v3233
        %v3235 = vsel %vm3220, %v2791, %v3234
        %v3236 = vsel %vm3208, %v2799, %v2795
        %v3237 = vsel %vm3210, %v2803, %v3236
        %v3238 = vsel %vm3212, %v2807, %v3237
        %v3239 = vsel %vm3214, %v2811, %v3238
        %v3240 = vsel %vm3216, %v2815, %v3239
        %v3241 = vsel %vm3218, %v2819, %v3240
        %v3242 = vsel %vm3220, %v2823, %v3241
        %v3243 = vsel %vm3208, %v2831, %v2827
        %v3244 = vsel %vm3210, %v2835, %v3243
        %v3245 = vsel %vm3212, %v2839, %v3244
        %v3246 = vsel %vm3214, %v2843, %v3245
        %v3247 = vsel %vm3216, %v2847, %v3246
        %v3248 = vsel %vm3218, %v2851, %v3247
        %v3249 = vsel %vm3220, %v2855, %v3248
        %v3250 = vsel %vm3208, %v2863, %v2859
        %v3251 = vsel %vm3210, %v2867, %v3250
        %v3252 = vsel %vm3212, %v2871, %v3251
        %v3253 = vsel %vm3214, %v2875, %v3252
        %v3254 = vsel %vm3216, %v2879, %v3253
        %v3255 = vsel %vm3218, %v2883, %v3254
        %v3256 = vsel %vm3220, %v2887, %v3255
        %v3257 = vsel %vm3208, %v2895, %v2891
        %v3258 = vsel %vm3210, %v2899, %v3257
        %v3259 = vsel %vm3212, %v2903, %v3258
        %v3260 = vsel %vm3214, %v2907, %v3259
        %v3261 = vsel %vm3216, %v2911, %v3260
        %v3262 = vsel %vm3218, %v2915, %v3261
        %v3263 = vsel %vm3220, %v2919, %v3262
        %v3264 = vsel %vm3208, %v2927, %v2923
        %v3265 = vsel %vm3210, %v2931, %v3264
        %v3266 = vsel %vm3212, %v2935, %v3265
        %v3267 = vsel %vm3214, %v2939, %v3266
        %v3268 = vsel %vm3216, %v2943, %v3267
        %v3269 = vsel %vm3218, %v2947, %v3268
        %v3270 = vsel %vm3220, %v2951, %v3269
        %v3271 = vsel %vm3208, %v2959, %v2955
        %v3272 = vsel %vm3210, %v2963, %v3271
        %v3273 = vsel %vm3212, %v2967, %v3272
        %v3274 = vsel %vm3214, %v2971, %v3273
        %v3275 = vsel %vm3216, %v2975, %v3274
        %v3276 = vsel %vm3218, %v2979, %v3275
        %v3277 = vsel %vm3220, %v2983, %v3276
        %v3278 = vsel %vm3208, %v2991, %v2987
        %v3279 = vsel %vm3210, %v2995, %v3278
        %v3280 = vsel %vm3212, %v2999, %v3279
        %v3281 = vsel %vm3214, %v3003, %v3280
        %v3282 = vsel %vm3216, %v3007, %v3281
        %v3283 = vsel %vm3218, %v3011, %v3282
        %v3284 = vsel %vm3220, %v3015, %v3283
        %v3285 = vsel %vm3208, %v3023, %v3019
        %v3286 = vsel %vm3210, %v3027, %v3285
        %v3287 = vsel %vm3212, %v3031, %v3286
        %v3288 = vsel %vm3214, %v3035, %v3287
        %v3289 = vsel %vm3216, %v3039, %v3288
        %v3290 = vsel %vm3218, %v3043, %v3289
        %v3291 = vsel %vm3220, %v3047, %v3290
        %v3292 = vsel %vm3208, %v3055, %v3051
        %v3293 = vsel %vm3210, %v3059, %v3292
        %v3294 = vsel %vm3212, %v3063, %v3293
        %v3295 = vsel %vm3214, %v3067, %v3294
        %v3296 = vsel %vm3216, %v3071, %v3295
        %v3297 = vsel %vm3218, %v3075, %v3296
        %v3298 = vsel %vm3220, %v3079, %v3297
        %v3299 = vsel %vm3208, %v3087, %v3083
        %v3300 = vsel %vm3210, %v3091, %v3299
        %v3301 = vsel %vm3212, %v3095, %v3300
        %v3302 = vsel %vm3214, %v3099, %v3301
        %v3303 = vsel %vm3216, %v3103, %v3302
        %v3304 = vsel %vm3218, %v3107, %v3303
        %v3305 = vsel %vm3220, %v3111, %v3304
        %v3306 = vsel %vm3208, %v3119, %v3115
        %v3307 = vsel %vm3210, %v3123, %v3306
        %v3308 = vsel %vm3212, %v3127, %v3307
        %v3309 = vsel %vm3214, %v3131, %v3308
        %v3310 = vsel %vm3216, %v3135, %v3309
        %v3311 = vsel %vm3218, %v3139, %v3310
        %v3312 = vsel %vm3220, %v3143, %v3311
        %v3313 = vsel %vm3208, %v3151, %v3147
        %v3314 = vsel %vm3210, %v3155, %v3313
        %v3315 = vsel %vm3212, %v3159, %v3314
        %v3316 = vsel %vm3214, %v3163, %v3315
        %v3317 = vsel %vm3216, %v3167, %v3316
        %v3318 = vsel %vm3218, %v3171, %v3317
        %v3319 = vsel %vm3220, %v3175, %v3318
        %v3320 = vsel %vm3208, %v3183, %v3179
        %v3321 = vsel %vm3210, %v3187, %v3320
        %v3322 = vsel %vm3212, %v3191, %v3321
        %v3323 = vsel %vm3214, %v3195, %v3322
        %v3324 = vsel %vm3216, %v3199, %v3323
        %v3325 = vsel %vm3218, %v3203, %v3324
        %v3326 = vsel %vm3220, %v3207, %v3325
        %3343 = vxpose.xlu0.b32.start [1/16] %v3221, 128
        %3344 = vxpose.xlu0.b32.cont [2/16] %v3228, 128
        %3345 = vxpose.xlu0.b32.cont [3/16] %v3235, 128
        %3346 = vxpose.xlu0.b32.cont [4/16] %v3242, 128
        %3347 = vxpose.xlu0.b32.cont [5/16] %v3249, 128
        %3348 = vxpose.xlu0.b32.cont [6/16] %v3256, 128
        %3349 = vxpose.xlu0.b32.cont [7/16] %v3263, 128
        %3350 = vxpose.xlu0.b32.cont [8/16] %v3270, 128
        %3351 = vxpose.xlu0.b32.cont [9/16] %v3277, 128
        %3352 = vxpose.xlu0.b32.cont [10/16] %v3284, 128
        %3353 = vxpose.xlu0.b32.cont [11/16] %v3291, 128
        %3354 = vxpose.xlu0.b32.cont [12/16] %v3298, 128
        %3355 = vxpose.xlu0.b32.cont [13/16] %v3305, 128
        %3356 = vxpose.xlu0.b32.cont [14/16] %v3312, 128
        %3357 = vxpose.xlu0.b32.cont [15/16] %v3319, 128
        %3358 = vxpose.xlu0.b32.end [16/16] %v3326, 128
        %v3359 = vpop.trf.xlu0
        %v3360 = vpop.trf.xlu0
        %v3361 = vpop.trf.xlu0
        %v3362 = vpop.trf.xlu0
        %v3363 = vpop.trf.xlu0
        %v3364 = vpop.trf.xlu0
        %v3365 = vpop.trf.xlu0
        %v3366 = vpop.trf.xlu0
        %v3367 = vpop.trf.xlu0
        %v3368 = vpop.trf.xlu0
        %v3369 = vpop.trf.xlu0
        %v3370 = vpop.trf.xlu0
        %v3371 = vpop.trf.xlu0
        %v3372 = vpop.trf.xlu0
        %v3373 = vpop.trf.xlu0
        %v3374 = vpop.trf.xlu0
        %v3375 = vrot.slane %v3359, 4
        %v3376 = vmax.f32 %v3359, %v3375
        %v3377 = vrot.slane %v3376, 2
        %v3378 = vmax.f32 %v3376, %v3377
        %v3379 = vrot.slane %v3378, 1
        %v3380 = vmax.f32 %v3378, %v3379
        %v3381 = vsub.f32 %v3359, %v3380
        %v3382 = vmul.f32 %v3381, 1.442695
        %v3383 = vpow.pop %v3382
        %v3384 = vrot.slane %v3383, 4
        %v3385 = vadd.f32 %v3383, %v3384
        %v3386 = vrot.slane %v3385, 2
        %v3387 = vadd.f32 %v3385, %v3386
        %v3388 = vrot.slane %v3387, 1
        %v3389 = vadd.f32 %v3387, %v3388
        %v3390 = vlog2.pop %v3389
        %v3391 = vmul.f32 %v3390, 0.6931472
        %v3392 = vsub.f32 %v3381, %v3391
        %3393 = vst [vmem:[%s164] sm:$0xff] %v3392
        %s3394 = sand.u32 %s93, 1
        %s3395 = scalar_lea.sflag [#allocation3], %s3394
        %s3396 = sand.u32 %s93, 1
        %s3397 = smul.addr %s3396, 8
        %s3398 = scalar_lea.vmem [#allocation2], %s3397
        // Predicated region
        $region33: #{tpu_custom_call.1} parent=31 // pred_check
          %p3399 = pneg %p103
        $region34: #{tpu_custom_call.1} parent=31 // pred_check_branch
          %3401 = sbr.rel (%p3399) target = $region36
        $region35: #{tpu_custom_call.1} parent=31 // pred_region
          %s3403 = ssub.s32 128, 128
          %3404 = vsyncadd %s3395, %s3403
          %s3405 = smul.addr %s17, 128
          %s3406 = scalar_lea.hbm %s3, %s3405
          %s3408 = sshll.u32 %s3398, 4
          %s3409 = int_to_ptr.vmem [resolvable:$true] %s3408
          %3411 = dma.vmem_to_hbm [thread:$0]  %s3409, 128, %s3406, %s3395
        $region36: #{tpu_custom_call.1} parent=31 // pred_fallthru
          _
      $region32: #{tpu_custom_call.1} parent=5 // pred_fallthru
        _
      %p3412 = scmp.le.s32.totalorder 2, %s12
      // Predicated region
      $region37: #{tpu_custom_call.1} parent=5 // pred_check
        %p3413 = pneg %p3412
      $region38: #{tpu_custom_call.1} parent=5 // pred_check_branch
        %3415 = sbr.rel (%p3413) target = $region40
      $region39: #{tpu_custom_call.1} parent=5 // pred_region
        %s3416 = ssub.s32 %s12, 2
        // Predicated region
        $region41: #{tpu_custom_call.1} parent=39 // pred_check
          %p3417 = pneg %p109
        $region42: #{tpu_custom_call.1} parent=39 // pred_check_branch
          %3419 = sbr.rel (%p3417) target = $region44
        $region43: #{tpu_custom_call.1} parent=39 // pred_region
          %s3420 = sand.u32 %s94, 1
          %s3421 = scalar_lea.sflag [#allocation3], %s3420
          %s3422 = sand.u32 %s94, 1
          %s3423 = smul.addr %s3422, 8
          %s3424 = scalar_lea.vmem [#allocation2], %s3423
          %3425 = dma.done %s3421, 128
        $region44: #{tpu_custom_call.1} parent=39 // pred_fallthru
          _
      $region40: #{tpu_custom_call.1} parent=5 // pred_fallthru
        _
    $region6: #{tpu_custom_call.1} parent=1 // loop_footer
      %s16 = sadd.s32 1, %s12
    $region7: #{tpu_custom_call.1} parent=1 // loop_footer_branch
      %11 = sbr.rel target = $region3
    $region8: #{tpu_custom_call.1} parent=1 // loop_exit
      _
    %3426 = vsyncpa [#allocation3], 1
    %s3427 = scalar_lea.sflag [#allocation3], 1
    %3428 = vsyncpa %s3427, 1

</llo_original>
